<compile_context>
chip_gen: v5e
topology: v5e:2x2
jax: 0.10.0
libtpu: 0.0.40
codegen_flags: <defaults>
</compile_context>

<pallas_src>
import functools

import jax
import jax.numpy as jnp
from jax.experimental import pallas as pl
from jax.experimental.pallas import tpu as pltpu

# ----------------------------- config (small, synthetic) --------------------
NUM_STAGE = 2
BATCH = 2
IMG_SIZE = 64
IN_CH = 3
MID_CH = 16                                   # "channel // 4" of the stand-in backbone
CHANNEL = 64                                  # "backbone.fc.in_features" stand-in
NUM_FMS = 1
NUM_VERT = 8
NUM_JOINT = 4
NUM_TOTAL = NUM_VERT + NUM_JOINT              # K = 12
HEATMAP_SIZE = 8                              # == IMG_SIZE // 8 so joint hm/dm fuse with feat_mid
HS2 = HEATMAP_SIZE * HEATMAP_SIZE             # 64
POOL_MID = 8                                  # img 64x64 -> 8x8
POOL_HIGH = 4                                 # 8x8 -> 2x2
MID_RES = IMG_SIZE // POOL_MID                # 8
MID_HW = MID_RES * MID_RES                    # 64
HIGH_RES = MID_RES // POOL_HIGH               # 2
FEATURE_SIZE = HIGH_RES * HIGH_RES            # 4 (spatial size of feat_high)
IN_DIM = NUM_FMS * FEATURE_SIZE + 3           # 7 (SAIGB graph feature dim)
LANES = BATCH * HS2                           # 128: batch lane-stacked spatial axis

assert MID_HW == HS2 and LANES == 128


# ----------------------------- the single fused kernel ----------------------
def _sar_kernel(img_ref, slab_ref, out_ref, *, offs, num_stage):
    """Entire SAR forward.  Channels/keypoints on sublanes, batch*spatial on lanes."""

    def C(key):                              # static, 8-aligned slice of the constant slab
        r0, nr, nc = offs[key]
        return slab_ref[r0:r0 + nr, :nc]

    def mm(a, b):
        return jnp.dot(a, b, preferred_element_type=jnp.float32)

    def leaky(x):
        return jnp.where(x >= 0, x, 0.1 * x)

    lane = jax.lax.broadcasted_iota(jnp.int32, (NUM_TOTAL, LANES), 1)
    first_half = lane < HS2                  # batch-0 lanes

    # -------- extract_mid stand-in: 1x1 conv + ReLU, both batches at once --------
    feat_mid = jnp.maximum(mm(C("w_mid"), img_ref[...]) + C("b_mid"), 0.0)    # (16, 128)
    pool4 = C("pool4")                                                        # (128, 8)

    lhm_j = dm_j = None
    p = dmap = None
    for s in range(num_stage):
        # ---- feature fusion (stage > 0): plain 1x1 conv, no activation ----
        if s == 0:
            feat = feat_mid
        else:
            feat = (mm(C(f"fw_m{s}"), feat_mid) + mm(C(f"fw_l{s}"), lhm_j)
                    + mm(C(f"fw_d{s}"), dm_j) + C(f"fb{s}"))                  # (16, 128)

        # ---- extract_high stand-in: avg-pool-4 (block-diag matmul) + 1x1 conv + ReLU ----
        pooled = mm(feat, pool4)                                              # (16, 8)
        high = jnp.maximum(mm(C(f"w_high{s}"), pooled) + C(f"b_high{s}"), 0.0)  # (64, 8)

        # ---- SAIGB: group conv + LeakyReLU(0.1); template concat folded into k1* ----
        g = leaky(mm(C(f"w_sai{s}"), high) + C(f"b_sai{s}"))                  # (8, 8)

        # ---- GBBMR graph convs: batch lane-stacked, FC weights block-diag over batch ----
        h1x = leaky(mm(mm(C(f"l_xy1_{s}"), g), C(f"w1x{s}")) + C(f"k1x{s}"))  # (8, 128)
        h1z = leaky(mm(mm(C(f"l_z1_{s}"), g), C(f"w1z{s}")) + C(f"k1z{s}"))   # (8, 128)
        # Dropout(0.5) == identity in eval mode.
        h2x = mm(mm(C(f"l_xy2_{s}"), h1x), C(f"w2x{s}"))                      # (8, 128)
        h2z = mm(mm(C(f"l_z2_{s}"), h1z), C(f"w2z{s}"))                       # (8, 128)

        # ---- mesh2pose + mesh/joint concat + beta scale, folded into e_* / hb_* ----
        sc = mm(C(f"e_hm{s}"), h2x) + C(f"hb_x{s}")    # (12, 128)  beta * heatmap_xy
        hz = mm(C(f"e_dm{s}"), h2z) + C(f"hb_z{s}")    # (12, 128)  heatmap_z

        # ---- per-batch-half softmax (batch lives in lane halves) + depth maps ----
        m0 = jnp.max(jnp.where(first_half, sc, -1e30), axis=1, keepdims=True)
        m1 = jnp.max(jnp.where(first_half, -1e30, sc), axis=1, keepdims=True)
        e = jnp.exp(sc - jnp.where(first_half, m0, m1))
        s0 = jnp.sum(jnp.where(first_half, e, 0.0), axis=1, keepdims=True)
        s1 = jnp.sum(jnp.where(first_half, 0.0, e), axis=1, keepdims=True)
        p = e * pl.reciprocal(jnp.where(first_half, s0, s1), approx=True)     # (12, 128)
        dmap = p * hz                                                         # (12, 128)

        if s < num_stage - 1:
            # joint rows feed the next stage's fuse conv directly (aligned sublane slice)
            lhm_j = p[NUM_VERT:NUM_TOTAL, :]                                  # (4, 128)
            dm_j = dmap[NUM_VERT:NUM_TOTAL, :]                                # (4, 128)

    # ---- soft-argmax as one MXU matmul (/half and -1 folded into cm_p) ----
    coord = mm(p, C("cm_p")) + mm(dmap, C("cm_d"))                            # (12, 128)
    # single 128-lane-dense output slab: [lhm | dm | coord(padded)]
    out_ref[...] = jnp.concatenate([p, dmap, coord], axis=1)                  # (12, 384)


# ----------------------------- constant slab packing ------------------------
class _SlabBuilder:
    """Packs all constants into one (R, 128) f32 slab: every constant starts at a
    sublane offset that is a multiple of 8 and at lane 0, so in-kernel extraction
    is a static ref slice and the whole parameter set is ONE HBM->VMEM DMA."""

    def __init__(self):
        self._blocks = []
        self._offs = {}
        self._rows = 0

    def add(self, key, arr):
        arr = jnp.asarray(arr, jnp.float32)
        assert arr.ndim == 2 and arr.shape[1] <= 128, (key, arr.shape)
        nr, nc = arr.shape
        pad_r = (-nr) % 8
        self._offs[key] = (self._rows, nr, nc)
        self._blocks.append(jnp.pad(arr, ((0, pad_r), (0, 128 - nc))))
        self._rows += nr + pad_r

    def build(self):
        return jnp.concatenate(self._blocks, axis=0), self._offs


def _laplacian(adj):
    return adj / (jnp.sum(adj, axis=1, keepdims=True) + 1e-05)


def _blockdiag(a, b):
    (r1, c1), (r2, c2) = a.shape, b.shape
    return jnp.concatenate(
        [jnp.concatenate([a, jnp.zeros((r1, c2), jnp.float32)], axis=1),
         jnp.concatenate([jnp.zeros((r2, c1), jnp.float32), b], axis=1)], axis=0)


def preprocess_params(params):
    """Build the packed constant slab + static offset table ONCE (outside the forward)."""
    f32 = jnp.float32
    sb = _SlabBuilder()

    # -------- shared --------
    sb.add("w_mid", params["mid_w"])                              # (16, 3)
    sb.add("b_mid", params["mid_b"].reshape(MID_CH, 1))
    hw = jnp.arange(MID_HW)
    h_idx, w_idx = hw // MID_RES, hw % MID_RES
    blk = (h_idx // POOL_HIGH) * HIGH_RES + (w_idx // POOL_HIGH)
    pool4 = (blk[:, None] == jnp.arange(FEATURE_SIZE)[None, :]).astype(f32)
    pool4 = pool4 / float(POOL_HIGH * POOL_HIGH)                  # (64, 4)
    sb.add("pool4", _blockdiag(pool4, pool4))                     # (128, 8) batch block-diag

    # soft-argmax matrices; /(size//2) and the -1 offset folded in (sum(p) == 1 per half)
    half = float(HEATMAP_SIZE // 2)
    wx = (jnp.arange(HS2) % HEATMAP_SIZE).astype(f32) / half - 1.0
    wy = (jnp.arange(HS2) // HEATMAP_SIZE).astype(f32) / half - 1.0
    cm_p = jnp.zeros((LANES, 128), f32)
    cm_p = cm_p.at[:HS2, 0].set(wx).at[:HS2, 1].set(wy)           # batch 0 -> cols 0,1
    cm_p = cm_p.at[HS2:, 3].set(wx).at[HS2:, 4].set(wy)           # batch 1 -> cols 3,4
    sb.add("cm_p", cm_p)
    cm_d = jnp.zeros((LANES, 128), f32)
    cm_d = cm_d.at[:HS2, 2].set(1.0).at[HS2:, 5].set(1.0)         # depth sums -> cols 2,5
    sb.add("cm_d", cm_d)

    # SAIGB feature placement + template rows (batch lane-stacked), folded offline
    template = params["template"]                                 # (V, 3)
    P_place = jnp.zeros((2 * FEATURE_SIZE, 2 * IN_DIM), f32)      # g-lane -> x-lane
    P_place = P_place.at[jnp.arange(FEATURE_SIZE), jnp.arange(FEATURE_SIZE)].set(1.0)
    P_place = P_place.at[FEATURE_SIZE + jnp.arange(FEATURE_SIZE),
                         IN_DIM + jnp.arange(FEATURE_SIZE)].set(1.0)
    T_full = jnp.zeros((NUM_VERT, 2 * IN_DIM), f32)
    T_full = T_full.at[:, FEATURE_SIZE:IN_DIM].set(template)
    T_full = T_full.at[:, IN_DIM + FEATURE_SIZE:].set(template)

    eye_v = jnp.eye(NUM_VERT, dtype=f32)
    for s, S in enumerate(params["stages"]):
        if s > 0:
            fw = params["fuse_w"][s - 1]                          # (16, 16 + 2J)
            sb.add(f"fw_m{s}", fw[:, :MID_CH])
            sb.add(f"fw_l{s}", fw[:, MID_CH:MID_CH + NUM_JOINT])
            sb.add(f"fw_d{s}", fw[:, MID_CH + NUM_JOINT:])
            sb.add(f"fb{s}", params["fuse_b"][s - 1].reshape(MID_CH, 1))
        sb.add(f"w_high{s}", S["high_w"])                         # (64, 16)
        sb.add(f"b_high{s}", S["high_b"].reshape(CHANNEL, 1))
        sb.add(f"w_sai{s}", S["saigb_w"])                         # (8, 64)
        sb.add(f"b_sai{s}", S["saigb_b"].reshape(NUM_FMS * NUM_VERT, 1))

        l_xy1, l_z1 = _laplacian(S["adj_xy1"]), _laplacian(S["adj_z1"])
        l_xy2, l_z2 = _laplacian(S["adj_xy2"]), _laplacian(S["adj_z2"])
        sb.add(f"l_xy1_{s}", l_xy1); sb.add(f"l_z1_{s}", l_z1)
        sb.add(f"l_xy2_{s}", l_xy2); sb.add(f"l_z2_{s}", l_z2)

        # first graph conv: block-diag over batch; template contribution precomputed
        for tag, gw, gb, L1 in (("x", S["gc_xy1_w"], S["gc_xy1_b"], l_xy1),
                                ("z", S["gc_z1_w"], S["gc_z1_b"], l_z1)):
            w1_bd = _blockdiag(gw, gw)                            # (14, 128)
            b1_bc = jnp.tile(gb, 2).reshape(1, 2 * HS2)           # (1, 128)
            sb.add(f"w1{tag}{s}", P_place @ w1_bd)                # (8, 128)
            sb.add(f"k1{tag}{s}", (L1 @ T_full) @ w1_bd + b1_bc)  # (8, 128)

        # second graph conv weights (block-diag over batch); biases folded into hb_* below
        b2x_bc = jnp.tile(S["gc_xy2_b"], 2).reshape(1, 2 * HS2)
        b2z_bc = jnp.tile(S["gc_z2_b"], 2).reshape(1, 2 * HS2)
        sb.add(f"w2x{s}", _blockdiag(S["gc_xy2_w"], S["gc_xy2_w"]))   # (128, 128)
        sb.add(f"w2z{s}", _blockdiag(S["gc_z2_w"], S["gc_z2_w"]))     # (128, 128)

        # mesh2pose + mesh/joint concat as one left matrix; beta folded into xy path
        e_hm = jnp.concatenate([eye_v, S["m2p_hm_w"]], axis=0)    # (12, 8)
        e_dm = jnp.concatenate([eye_v, S["m2p_dm_w"]], axis=0)    # (12, 8)
        bias_hm = jnp.concatenate([jnp.zeros((NUM_VERT,), f32), S["m2p_hm_b"]]).reshape(NUM_TOTAL, 1)
        bias_dm = jnp.concatenate([jnp.zeros((NUM_VERT,), f32), S["m2p_dm_b"]]).reshape(NUM_TOTAL, 1)
        hb_x = bias_hm + jnp.sum(e_hm, axis=1, keepdims=True) * b2x_bc   # (12, 128)
        hb_z = bias_dm + jnp.sum(e_dm, axis=1, keepdims=True) * b2z_bc   # (12, 128)
        beta = S["beta"].reshape(NUM_TOTAL, 1)
        sb.add(f"e_hm{s}", beta * e_hm)
        sb.add(f"e_dm{s}", e_dm)
        sb.add(f"hb_x{s}", beta * hb_x)
        sb.add(f"hb_z{s}", hb_z)

    return sb.build()


# ----------------------------- forward ---------------------------------------
def make_sar_forward(offs):
    kernel = functools.partial(_sar_kernel, offs=offs, num_stage=NUM_STAGE)

    @jax.jit
    def fwd(slab, img):
        """img: (B, 3, IMG_SIZE, IMG_SIZE) NCHW.  Returns (coords, lhm, dm) of last stage."""
        B = img.shape[0]
        assert B == BATCH
        # stand-in for the stride-8 backbone head: stride-8 average pooling
        pooled = img.reshape(B, IN_CH, MID_RES, POOL_MID, MID_RES, POOL_MID).mean(axis=(3, 5))
        # channels on sublanes, batch*spatial lane-stacked -> (3, 128)
        img_ls = pooled.reshape(B, IN_CH, MID_HW).transpose(1, 0, 2).reshape(IN_CH, LANES)

        out = pl.pallas_call(
            kernel,
            out_shape=jax.ShapeDtypeStruct((NUM_TOTAL, 2 * LANES + 128), jnp.float32),
            compiler_params=pltpu.CompilerParams(vmem_limit_bytes=8 * 1024 * 1024),
        )(img_ls, slab)

        lhm = out[:, :LANES].reshape(NUM_TOTAL, B, HEATMAP_SIZE, HEATMAP_SIZE).transpose(1, 0, 2, 3)
        dm = out[:, LANES:2 * LANES].reshape(NUM_TOTAL, B, HEATMAP_SIZE, HEATMAP_SIZE).transpose(1, 0, 2, 3)
        coord = out[:, 2 * LANES:2 * LANES + 3 * B].reshape(NUM_TOTAL, B, 3).transpose(1, 0, 2)
        return coord, lhm, dm

    return fwd


# ----------------------------- deterministic params --------------------------
def init_params(key):
    keys = iter(jax.random.split(key, 128))

    def nrm(shape, scale=0.1):
        return scale * jax.random.normal(next(keys), shape, dtype=jnp.float32)

    P = {
        "mid_w": nrm((MID_CH, IN_CH)),                 # 1x1 conv (out, in)
        "mid_b": nrm((MID_CH,)),
        "template": nrm((NUM_VERT, 3)),
        "stages": [], "fuse_w": [], "fuse_b": [],
    }
    eye = jnp.eye(NUM_VERT, dtype=jnp.float32)
    for i in range(NUM_STAGE):
        S = {
            "high_w": nrm((CHANNEL, MID_CH)), "high_b": nrm((CHANNEL,)),
            "saigb_w": nrm((NUM_FMS * NUM_VERT, CHANNEL)),
            "saigb_b": nrm((NUM_FMS * NUM_VERT,)),
            "adj_xy1": eye, "adj_xy2": eye, "adj_z1": eye, "adj_z2": eye,
            "gc_xy1_w": nrm((IN_DIM, HS2)), "gc_xy1_b": nrm((HS2,)),
            "gc_xy2_w": nrm((HS2, HS2)), "gc_xy2_b": nrm((HS2,)),
            "gc_z1_w": nrm((IN_DIM, HS2)), "gc_z1_b": nrm((HS2,)),
            "gc_z2_w": nrm((HS2, HS2)), "gc_z2_b": nrm((HS2,)),
            "m2p_hm_w": nrm((NUM_JOINT, NUM_VERT)), "m2p_hm_b": nrm((NUM_JOINT,)),
            "m2p_dm_w": nrm((NUM_JOINT, NUM_VERT)), "m2p_dm_b": nrm((NUM_JOINT,)),
            "beta": 1.0 + nrm((NUM_TOTAL,), scale=0.01),
        }
        P["stages"].append(S)
        if i > 0:
            P["fuse_w"].append(nrm((MID_CH, MID_CH + 2 * NUM_JOINT)))
            P["fuse_b"].append(nrm((MID_CH,)))
    return P


# ----------------------------- main ------------------------------------------
if __name__ == "__main__":
    key = jax.random.PRNGKey(0)
    k_img, k_par = jax.random.split(key)
    img = jax.random.normal(k_img, (BATCH, IN_CH, IMG_SIZE, IMG_SIZE), dtype=jnp.float32)

    params = init_params(k_par)
    slab, offsets = preprocess_params(params)       # done once, outside the forward
    fwd = make_sar_forward(offsets)

    coords, latent_heatmaps, depth_maps = fwd(slab, img)
    jax.block_until_ready((coords, latent_heatmaps, depth_maps))

    assert coords.shape == (BATCH, NUM_TOTAL, 3)
    assert latent_heatmaps.shape == (BATCH, NUM_TOTAL, HEATMAP_SIZE, HEATMAP_SIZE)
    assert depth_maps.shape == (BATCH, NUM_TOTAL, HEATMAP_SIZE, HEATMAP_SIZE)
    print("KERNEL_OK")
</pallas_src>

<mosaic_0001>
module attributes {stable_mosaic.version = 11 : i64} {
  func.func @_sar_kernel(%arg0: memref<3x128xf32, #tpu.memory_space<vmem>>, %arg1: memref<1536x128xf32, #tpu.memory_space<vmem>>, %arg2: memref<12x384xf32, #tpu.memory_space<vmem>>) attributes {dimension_semantics = [], scalar_prefetch = 0 : i64, scratch_operands = 0 : i64, tpu.core_type = #tpu.core_type<tc>} {
    %0 = tpu.iota {dimensions = array<i32: 1>} : vector<12x128xi32>
    %c64_i32 = arith.constant 64 : i32
    %1 = vector.broadcast %c64_i32 : i32 to vector<12x128xi32>
    %2 = arith.cmpi slt, %0, %1 : vector<12x128xi32>
    %c0 = arith.constant 0 : index
    %c0_0 = arith.constant 0 : index
    %3 = vector.load %arg1[%c0, %c0_0] : memref<1536x128xf32, #tpu.memory_space<vmem>>, vector<16x3xf32>
    %c0_1 = arith.constant 0 : index
    %c0_2 = arith.constant 0 : index
    %4 = vector.load %arg0[%c0_1, %c0_2] : memref<3x128xf32, #tpu.memory_space<vmem>>, vector<3x128xf32>
    %cst = arith.constant dense<0.000000e+00> : vector<16x128xf32>
    %5 = tpu.matmul %3, %4, %cst {dimension_numbers = #tpu.dot_dimension_numbers<[1], [0], [0], [1], [0, 0, 1, 1], [], []>} : vector<16x3xf32>, vector<3x128xf32>, vector<16x128xf32> -> vector<16x128xf32>
    %c16 = arith.constant 16 : index
    %c0_3 = arith.constant 0 : index
    %6 = vector.load %arg1[%c16, %c0_3] : memref<1536x128xf32, #tpu.memory_space<vmem>>, vector<16x1xf32>
    %7 = vector.broadcast %6 : vector<16x1xf32> to vector<16x128xf32>
    %8 = arith.addf %5, %7 : vector<16x128xf32>
    %cst_4 = arith.constant 0.000000e+00 : f32
    %9 = vector.broadcast %cst_4 : f32 to vector<16x128xf32>
    %10 = arith.maximumf %8, %9 : vector<16x128xf32>
    %c32 = arith.constant 32 : index
    %c0_5 = arith.constant 0 : index
    %11 = vector.load %arg1[%c32, %c0_5] : memref<1536x128xf32, #tpu.memory_space<vmem>>, vector<128x8xf32>
    %cst_6 = arith.constant dense<0.000000e+00> : vector<16x8xf32>
    %12 = tpu.matmul %10, %11, %cst_6 {dimension_numbers = #tpu.dot_dimension_numbers<[1], [0], [0], [1], [0, 0, 1, 1], [], []>} : vector<16x128xf32>, vector<128x8xf32>, vector<16x8xf32> -> vector<16x8xf32>
    %c416 = arith.constant 416 : index
    %c0_7 = arith.constant 0 : index
    %13 = vector.load %arg1[%c416, %c0_7] : memref<1536x128xf32, #tpu.memory_space<vmem>>, vector<64x16xf32>
    %cst_8 = arith.constant dense<0.000000e+00> : vector<64x8xf32>
    %14 = tpu.matmul %13, %12, %cst_8 {dimension_numbers = #tpu.dot_dimension_numbers<[1], [0], [0], [1], [0, 0, 1, 1], [], []>} : vector<64x16xf32>, vector<16x8xf32>, vector<64x8xf32> -> vector<64x8xf32>
    %c480 = arith.constant 480 : index
    %c0_9 = arith.constant 0 : index
    %15 = vector.load %arg1[%c480, %c0_9] : memref<1536x128xf32, #tpu.memory_space<vmem>>, vector<64x1xf32>
    %16 = vector.broadcast %15 : vector<64x1xf32> to vector<64x8xf32>
    %17 = arith.addf %14, %16 : vector<64x8xf32>
    %cst_10 = arith.constant 0.000000e+00 : f32
    %18 = vector.broadcast %cst_10 : f32 to vector<64x8xf32>
    %19 = arith.maximumf %17, %18 : vector<64x8xf32>
    %c544 = arith.constant 544 : index
    %c0_11 = arith.constant 0 : index
    %20 = vector.load %arg1[%c544, %c0_11] : memref<1536x128xf32, #tpu.memory_space<vmem>>, vector<8x64xf32>
    %cst_12 = arith.constant dense<0.000000e+00> : vector<8x8xf32>
    %21 = tpu.matmul %20, %19, %cst_12 {dimension_numbers = #tpu.dot_dimension_numbers<[1], [0], [0], [1], [0, 0, 1, 1], [], []>} : vector<8x64xf32>, vector<64x8xf32>, vector<8x8xf32> -> vector<8x8xf32>
    %c552 = arith.constant 552 : index
    %c0_13 = arith.constant 0 : index
    %22 = vector.load %arg1[%c552, %c0_13] : memref<1536x128xf32, #tpu.memory_space<vmem>>, vector<8x1xf32>
    %23 = vector.broadcast %22 : vector<8x1xf32> to vector<8x8xf32>
    %24 = arith.addf %21, %23 : vector<8x8xf32>
    %cst_14 = arith.constant 0.000000e+00 : f32
    %25 = vector.broadcast %cst_14 : f32 to vector<8x8xf32>
    %26 = arith.cmpf oge, %24, %25 : vector<8x8xf32>
    %cst_15 = arith.constant 1.000000e-01 : f32
    %27 = vector.broadcast %cst_15 : f32 to vector<8x8xf32>
    %28 = arith.mulf %27, %24 : vector<8x8xf32>
    %29 = arith.select %26, %24, %28 : vector<8x8xi1>, vector<8x8xf32>
    %c560 = arith.constant 560 : index
    %c0_16 = arith.constant 0 : index
    %30 = vector.load %arg1[%c560, %c0_16] : memref<1536x128xf32, #tpu.memory_space<vmem>>, vector<8x8xf32>
    %cst_17 = arith.constant dense<0.000000e+00> : vector<8x8xf32>
    %31 = tpu.matmul %30, %29, %cst_17 {dimension_numbers = #tpu.dot_dimension_numbers<[1], [0], [0], [1], [0, 0, 1, 1], [], []>} : vector<8x8xf32>, vector<8x8xf32>, vector<8x8xf32> -> vector<8x8xf32>
    %c592 = arith.constant 592 : index
    %c0_18 = arith.constant 0 : index
    %32 = vector.load %arg1[%c592, %c0_18] : memref<1536x128xf32, #tpu.memory_space<vmem>>, vector<8x128xf32>
    %cst_19 = arith.constant dense<0.000000e+00> : vector<8x128xf32>
    %33 = tpu.matmul %31, %32, %cst_19 {dimension_numbers = #tpu.dot_dimension_numbers<[1], [0], [0], [1], [0, 0, 1, 1], [], []>} : vector<8x8xf32>, vector<8x128xf32>, vector<8x128xf32> -> vector<8x128xf32>
    %c600 = arith.constant 600 : index
    %c0_20 = arith.constant 0 : index
    %34 = vector.load %arg1[%c600, %c0_20] : memref<1536x128xf32, #tpu.memory_space<vmem>>, vector<8x128xf32>
    %35 = arith.addf %33, %34 : vector<8x128xf32>
    %cst_21 = arith.constant 0.000000e+00 : f32
    %36 = vector.broadcast %cst_21 : f32 to vector<8x128xf32>
    %37 = arith.cmpf oge, %35, %36 : vector<8x128xf32>
    %cst_22 = arith.constant 1.000000e-01 : f32
    %38 = vector.broadcast %cst_22 : f32 to vector<8x128xf32>
    %39 = arith.mulf %38, %35 : vector<8x128xf32>
    %40 = arith.select %37, %35, %39 : vector<8x128xi1>, vector<8x128xf32>
    %c568 = arith.constant 568 : index
    %c0_23 = arith.constant 0 : index
    %41 = vector.load %arg1[%c568, %c0_23] : memref<1536x128xf32, #tpu.memory_space<vmem>>, vector<8x8xf32>
    %cst_24 = arith.constant dense<0.000000e+00> : vector<8x8xf32>
    %42 = tpu.matmul %41, %29, %cst_24 {dimension_numbers = #tpu.dot_dimension_numbers<[1], [0], [0], [1], [0, 0, 1, 1], [], []>} : vector<8x8xf32>, vector<8x8xf32>, vector<8x8xf32> -> vector<8x8xf32>
    %c608 = arith.constant 608 : index
    %c0_25 = arith.constant 0 : index
    %43 = vector.load %arg1[%c608, %c0_25] : memref<1536x128xf32, #tpu.memory_space<vmem>>, vector<8x128xf32>
    %cst_26 = arith.constant dense<0.000000e+00> : vector<8x128xf32>
    %44 = tpu.matmul %42, %43, %cst_26 {dimension_numbers = #tpu.dot_dimension_numbers<[1], [0], [0], [1], [0, 0, 1, 1], [], []>} : vector<8x8xf32>, vector<8x128xf32>, vector<8x128xf32> -> vector<8x128xf32>
    %c616 = arith.constant 616 : index
    %c0_27 = arith.constant 0 : index
    %45 = vector.load %arg1[%c616, %c0_27] : memref<1536x128xf32, #tpu.memory_space<vmem>>, vector<8x128xf32>
    %46 = arith.addf %44, %45 : vector<8x128xf32>
    %cst_28 = arith.constant 0.000000e+00 : f32
    %47 = vector.broadcast %cst_28 : f32 to vector<8x128xf32>
    %48 = arith.cmpf oge, %46, %47 : vector<8x128xf32>
    %cst_29 = arith.constant 1.000000e-01 : f32
    %49 = vector.broadcast %cst_29 : f32 to vector<8x128xf32>
    %50 = arith.mulf %49, %46 : vector<8x128xf32>
    %51 = arith.select %48, %46, %50 : vector<8x128xi1>, vector<8x128xf32>
    %c576 = arith.constant 576 : index
    %c0_30 = arith.constant 0 : index
    %52 = vector.load %arg1[%c576, %c0_30] : memref<1536x128xf32, #tpu.memory_space<vmem>>, vector<8x8xf32>
    %cst_31 = arith.constant dense<0.000000e+00> : vector<8x128xf32>
    %53 = tpu.matmul %52, %40, %cst_31 {dimension_numbers = #tpu.dot_dimension_numbers<[1], [0], [0], [1], [0, 0, 1, 1], [], []>} : vector<8x8xf32>, vector<8x128xf32>, vector<8x128xf32> -> vector<8x128xf32>
    %c624 = arith.constant 624 : index
    %c0_32 = arith.constant 0 : index
    %54 = vector.load %arg1[%c624, %c0_32] : memref<1536x128xf32, #tpu.memory_space<vmem>>, vector<128x128xf32>
    %cst_33 = arith.constant dense<0.000000e+00> : vector<8x128xf32>
    %55 = tpu.matmul %53, %54, %cst_33 {dimension_numbers = #tpu.dot_dimension_numbers<[1], [0], [0], [1], [0, 0, 1, 1], [], []>} : vector<8x128xf32>, vector<128x128xf32>, vector<8x128xf32> -> vector<8x128xf32>
    %c584 = arith.constant 584 : index
    %c0_34 = arith.constant 0 : index
    %56 = vector.load %arg1[%c584, %c0_34] : memref<1536x128xf32, #tpu.memory_space<vmem>>, vector<8x8xf32>
    %cst_35 = arith.constant dense<0.000000e+00> : vector<8x128xf32>
    %57 = tpu.matmul %56, %51, %cst_35 {dimension_numbers = #tpu.dot_dimension_numbers<[1], [0], [0], [1], [0, 0, 1, 1], [], []>} : vector<8x8xf32>, vector<8x128xf32>, vector<8x128xf32> -> vector<8x128xf32>
    %c752 = arith.constant 752 : index
    %c0_36 = arith.constant 0 : index
    %58 = vector.load %arg1[%c752, %c0_36] : memref<1536x128xf32, #tpu.memory_space<vmem>>, vector<128x128xf32>
    %cst_37 = arith.constant dense<0.000000e+00> : vector<8x128xf32>
    %59 = tpu.matmul %57, %58, %cst_37 {dimension_numbers = #tpu.dot_dimension_numbers<[1], [0], [0], [1], [0, 0, 1, 1], [], []>} : vector<8x128xf32>, vector<128x128xf32>, vector<8x128xf32> -> vector<8x128xf32>
    %c880 = arith.constant 880 : index
    %c0_38 = arith.constant 0 : index
    %60 = vector.load %arg1[%c880, %c0_38] : memref<1536x128xf32, #tpu.memory_space<vmem>>, vector<12x8xf32>
    %cst_39 = arith.constant dense<0.000000e+00> : vector<12x128xf32>
    %61 = tpu.matmul %60, %55, %cst_39 {dimension_numbers = #tpu.dot_dimension_numbers<[1], [0], [0], [1], [0, 0, 1, 1], [], []>} : vector<12x8xf32>, vector<8x128xf32>, vector<12x128xf32> -> vector<12x128xf32>
    %c912 = arith.constant 912 : index
    %c0_40 = arith.constant 0 : index
    %62 = vector.load %arg1[%c912, %c0_40] : memref<1536x128xf32, #tpu.memory_space<vmem>>, vector<12x128xf32>
    %63 = arith.addf %61, %62 : vector<12x128xf32>
    %c896 = arith.constant 896 : index
    %c0_41 = arith.constant 0 : index
    %64 = vector.load %arg1[%c896, %c0_41] : memref<1536x128xf32, #tpu.memory_space<vmem>>, vector<12x8xf32>
    %cst_42 = arith.constant dense<0.000000e+00> : vector<12x128xf32>
    %65 = tpu.matmul %64, %59, %cst_42 {dimension_numbers = #tpu.dot_dimension_numbers<[1], [0], [0], [1], [0, 0, 1, 1], [], []>} : vector<12x8xf32>, vector<8x128xf32>, vector<12x128xf32> -> vector<12x128xf32>
    %c928 = arith.constant 928 : index
    %c0_43 = arith.constant 0 : index
    %66 = vector.load %arg1[%c928, %c0_43] : memref<1536x128xf32, #tpu.memory_space<vmem>>, vector<12x128xf32>
    %67 = arith.addf %65, %66 : vector<12x128xf32>
    %cst_44 = arith.constant -1.000000e+30 : f32
    %68 = vector.broadcast %cst_44 : f32 to vector<12x128xf32>
    %69 = arith.select %2, %63, %68 : vector<12x128xi1>, vector<12x128xf32>
    %cst_45 = arith.constant dense<0xFF800000> : vector<12xf32>
    %70 = vector.multi_reduction <maximumf>, %69, %cst_45 [1] : vector<12x128xf32> to vector<12xf32>
    %71 = vector.shape_cast %70 : vector<12xf32> to vector<12x1xf32>
    %cst_46 = arith.constant -1.000000e+30 : f32
    %72 = vector.broadcast %cst_46 : f32 to vector<12x128xf32>
    %73 = arith.select %2, %72, %63 : vector<12x128xi1>, vector<12x128xf32>
    %cst_47 = arith.constant dense<0xFF800000> : vector<12xf32>
    %74 = vector.multi_reduction <maximumf>, %73, %cst_47 [1] : vector<12x128xf32> to vector<12xf32>
    %75 = vector.shape_cast %74 : vector<12xf32> to vector<12x1xf32>
    %76 = vector.shape_cast %71 : vector<12x1xf32> to vector<12x1xf32>
    %77 = vector.broadcast %76 : vector<12x1xf32> to vector<12x128xf32>
    %78 = vector.shape_cast %75 : vector<12x1xf32> to vector<12x1xf32>
    %79 = vector.broadcast %78 : vector<12x1xf32> to vector<12x128xf32>
    %80 = arith.select %2, %77, %79 : vector<12x128xi1>, vector<12x128xf32>
    %81 = arith.subf %63, %80 : vector<12x128xf32>
    %82 = math.exp %81 : vector<12x128xf32>
    %cst_48 = arith.constant 0.000000e+00 : f32
    %83 = vector.broadcast %cst_48 : f32 to vector<12x128xf32>
    %84 = arith.select %2, %82, %83 : vector<12x128xi1>, vector<12x128xf32>
    %cst_49 = arith.constant dense<0.000000e+00> : vector<12xf32>
    %85 = vector.multi_reduction <add>, %84, %cst_49 [1] : vector<12x128xf32> to vector<12xf32>
    %86 = vector.shape_cast %85 : vector<12xf32> to vector<12x1xf32>
    %cst_50 = arith.constant 0.000000e+00 : f32
    %87 = vector.broadcast %cst_50 : f32 to vector<12x128xf32>
    %88 = arith.select %2, %87, %82 : vector<12x128xi1>, vector<12x128xf32>
    %cst_51 = arith.constant dense<0.000000e+00> : vector<12xf32>
    %89 = vector.multi_reduction <add>, %88, %cst_51 [1] : vector<12x128xf32> to vector<12xf32>
    %90 = vector.shape_cast %89 : vector<12xf32> to vector<12x1xf32>
    %91 = vector.shape_cast %86 : vector<12x1xf32> to vector<12x1xf32>
    %92 = vector.broadcast %91 : vector<12x1xf32> to vector<12x128xf32>
    %93 = vector.shape_cast %90 : vector<12x1xf32> to vector<12x1xf32>
    %94 = vector.broadcast %93 : vector<12x1xf32> to vector<12x128xf32>
    %95 = arith.select %2, %92, %94 : vector<12x128xi1>, vector<12x128xf32>
    %96 = tpu.reciprocal %95 {approx = true} : vector<12x128xf32> -> vector<12x128xf32>
    %97 = arith.mulf %82, %96 : vector<12x128xf32>
    %98 = arith.mulf %97, %67 : vector<12x128xf32>
    %99 = vector.extract_strided_slice %97 {offsets = [8, 0], sizes = [4, 128], strides = [1, 1]} : vector<12x128xf32> to vector<4x128xf32>
    %100 = vector.extract_strided_slice %98 {offsets = [8, 0], sizes = [4, 128], strides = [1, 1]} : vector<12x128xf32> to vector<4x128xf32>
    %c944 = arith.constant 944 : index
    %c0_52 = arith.constant 0 : index
    %101 = vector.load %arg1[%c944, %c0_52] : memref<1536x128xf32, #tpu.memory_space<vmem>>, vector<16x16xf32>
    %cst_53 = arith.constant dense<0.000000e+00> : vector<16x128xf32>
    %102 = tpu.matmul %101, %10, %cst_53 {dimension_numbers = #tpu.dot_dimension_numbers<[1], [0], [0], [1], [0, 0, 1, 1], [], []>} : vector<16x16xf32>, vector<16x128xf32>, vector<16x128xf32> -> vector<16x128xf32>
    %c960 = arith.constant 960 : index
    %c0_54 = arith.constant 0 : index
    %103 = vector.load %arg1[%c960, %c0_54] : memref<1536x128xf32, #tpu.memory_space<vmem>>, vector<16x4xf32>
    %cst_55 = arith.constant dense<0.000000e+00> : vector<16x128xf32>
    %104 = tpu.matmul %103, %99, %cst_55 {dimension_numbers = #tpu.dot_dimension_numbers<[1], [0], [0], [1], [0, 0, 1, 1], [], []>} : vector<16x4xf32>, vector<4x128xf32>, vector<16x128xf32> -> vector<16x128xf32>
    %105 = arith.addf %102, %104 : vector<16x128xf32>
    %c976 = arith.constant 976 : index
    %c0_56 = arith.constant 0 : index
    %106 = vector.load %arg1[%c976, %c0_56] : memref<1536x128xf32, #tpu.memory_space<vmem>>, vector<16x4xf32>
    %cst_57 = arith.constant dense<0.000000e+00> : vector<16x128xf32>
    %107 = tpu.matmul %106, %100, %cst_57 {dimension_numbers = #tpu.dot_dimension_numbers<[1], [0], [0], [1], [0, 0, 1, 1], [], []>} : vector<16x4xf32>, vector<4x128xf32>, vector<16x128xf32> -> vector<16x128xf32>
    %108 = arith.addf %105, %107 : vector<16x128xf32>
    %c992 = arith.constant 992 : index
    %c0_58 = arith.constant 0 : index
    %109 = vector.load %arg1[%c992, %c0_58] : memref<1536x128xf32, #tpu.memory_space<vmem>>, vector<16x1xf32>
    %110 = vector.broadcast %109 : vector<16x1xf32> to vector<16x128xf32>
    %111 = arith.addf %108, %110 : vector<16x128xf32>
    %cst_59 = arith.constant dense<0.000000e+00> : vector<16x8xf32>
    %112 = tpu.matmul %111, %11, %cst_59 {dimension_numbers = #tpu.dot_dimension_numbers<[1], [0], [0], [1], [0, 0, 1, 1], [], []>} : vector<16x128xf32>, vector<128x8xf32>, vector<16x8xf32> -> vector<16x8xf32>
    %c1008 = arith.constant 1008 : index
    %c0_60 = arith.constant 0 : index
    %113 = vector.load %arg1[%c1008, %c0_60] : memref<1536x128xf32, #tpu.memory_space<vmem>>, vector<64x16xf32>
    %cst_61 = arith.constant dense<0.000000e+00> : vector<64x8xf32>
    %114 = tpu.matmul %113, %112, %cst_61 {dimension_numbers = #tpu.dot_dimension_numbers<[1], [0], [0], [1], [0, 0, 1, 1], [], []>} : vector<64x16xf32>, vector<16x8xf32>, vector<64x8xf32> -> vector<64x8xf32>
    %c1072 = arith.constant 1072 : index
    %c0_62 = arith.constant 0 : index
    %115 = vector.load %arg1[%c1072, %c0_62] : memref<1536x128xf32, #tpu.memory_space<vmem>>, vector<64x1xf32>
    %116 = vector.broadcast %115 : vector<64x1xf32> to vector<64x8xf32>
    %117 = arith.addf %114, %116 : vector<64x8xf32>
    %cst_63 = arith.constant 0.000000e+00 : f32
    %118 = vector.broadcast %cst_63 : f32 to vector<64x8xf32>
    %119 = arith.maximumf %117, %118 : vector<64x8xf32>
    %c1136 = arith.constant 1136 : index
    %c0_64 = arith.constant 0 : index
    %120 = vector.load %arg1[%c1136, %c0_64] : memref<1536x128xf32, #tpu.memory_space<vmem>>, vector<8x64xf32>
    %cst_65 = arith.constant dense<0.000000e+00> : vector<8x8xf32>
    %121 = tpu.matmul %120, %119, %cst_65 {dimension_numbers = #tpu.dot_dimension_numbers<[1], [0], [0], [1], [0, 0, 1, 1], [], []>} : vector<8x64xf32>, vector<64x8xf32>, vector<8x8xf32> -> vector<8x8xf32>
    %c1144 = arith.constant 1144 : index
    %c0_66 = arith.constant 0 : index
    %122 = vector.load %arg1[%c1144, %c0_66] : memref<1536x128xf32, #tpu.memory_space<vmem>>, vector<8x1xf32>
    %123 = vector.broadcast %122 : vector<8x1xf32> to vector<8x8xf32>
    %124 = arith.addf %121, %123 : vector<8x8xf32>
    %cst_67 = arith.constant 0.000000e+00 : f32
    %125 = vector.broadcast %cst_67 : f32 to vector<8x8xf32>
    %126 = arith.cmpf oge, %124, %125 : vector<8x8xf32>
    %cst_68 = arith.constant 1.000000e-01 : f32
    %127 = vector.broadcast %cst_68 : f32 to vector<8x8xf32>
    %128 = arith.mulf %127, %124 : vector<8x8xf32>
    %129 = arith.select %126, %124, %128 : vector<8x8xi1>, vector<8x8xf32>
    %c1152 = arith.constant 1152 : index
    %c0_69 = arith.constant 0 : index
    %130 = vector.load %arg1[%c1152, %c0_69] : memref<1536x128xf32, #tpu.memory_space<vmem>>, vector<8x8xf32>
    %cst_70 = arith.constant dense<0.000000e+00> : vector<8x8xf32>
    %131 = tpu.matmul %130, %129, %cst_70 {dimension_numbers = #tpu.dot_dimension_numbers<[1], [0], [0], [1], [0, 0, 1, 1], [], []>} : vector<8x8xf32>, vector<8x8xf32>, vector<8x8xf32> -> vector<8x8xf32>
    %c1184 = arith.constant 1184 : index
    %c0_71 = arith.constant 0 : index
    %132 = vector.load %arg1[%c1184, %c0_71] : memref<1536x128xf32, #tpu.memory_space<vmem>>, vector<8x128xf32>
    %cst_72 = arith.constant dense<0.000000e+00> : vector<8x128xf32>
    %133 = tpu.matmul %131, %132, %cst_72 {dimension_numbers = #tpu.dot_dimension_numbers<[1], [0], [0], [1], [0, 0, 1, 1], [], []>} : vector<8x8xf32>, vector<8x128xf32>, vector<8x128xf32> -> vector<8x128xf32>
    %c1192 = arith.constant 1192 : index
    %c0_73 = arith.constant 0 : index
    %134 = vector.load %arg1[%c1192, %c0_73] : memref<1536x128xf32, #tpu.memory_space<vmem>>, vector<8x128xf32>
    %135 = arith.addf %133, %134 : vector<8x128xf32>
    %cst_74 = arith.constant 0.000000e+00 : f32
    %136 = vector.broadcast %cst_74 : f32 to vector<8x128xf32>
    %137 = arith.cmpf oge, %135, %136 : vector<8x128xf32>
    %cst_75 = arith.constant 1.000000e-01 : f32
    %138 = vector.broadcast %cst_75 : f32 to vector<8x128xf32>
    %139 = arith.mulf %138, %135 : vector<8x128xf32>
    %140 = arith.select %137, %135, %139 : vector<8x128xi1>, vector<8x128xf32>
    %c1160 = arith.constant 1160 : index
    %c0_76 = arith.constant 0 : index
    %141 = vector.load %arg1[%c1160, %c0_76] : memref<1536x128xf32, #tpu.memory_space<vmem>>, vector<8x8xf32>
    %cst_77 = arith.constant dense<0.000000e+00> : vector<8x8xf32>
    %142 = tpu.matmul %141, %129, %cst_77 {dimension_numbers = #tpu.dot_dimension_numbers<[1], [0], [0], [1], [0, 0, 1, 1], [], []>} : vector<8x8xf32>, vector<8x8xf32>, vector<8x8xf32> -> vector<8x8xf32>
    %c1200 = arith.constant 1200 : index
    %c0_78 = arith.constant 0 : index
    %143 = vector.load %arg1[%c1200, %c0_78] : memref<1536x128xf32, #tpu.memory_space<vmem>>, vector<8x128xf32>
    %cst_79 = arith.constant dense<0.000000e+00> : vector<8x128xf32>
    %144 = tpu.matmul %142, %143, %cst_79 {dimension_numbers = #tpu.dot_dimension_numbers<[1], [0], [0], [1], [0, 0, 1, 1], [], []>} : vector<8x8xf32>, vector<8x128xf32>, vector<8x128xf32> -> vector<8x128xf32>
    %c1208 = arith.constant 1208 : index
    %c0_80 = arith.constant 0 : index
    %145 = vector.load %arg1[%c1208, %c0_80] : memref<1536x128xf32, #tpu.memory_space<vmem>>, vector<8x128xf32>
    %146 = arith.addf %144, %145 : vector<8x128xf32>
    %cst_81 = arith.constant 0.000000e+00 : f32
    %147 = vector.broadcast %cst_81 : f32 to vector<8x128xf32>
    %148 = arith.cmpf oge, %146, %147 : vector<8x128xf32>
    %cst_82 = arith.constant 1.000000e-01 : f32
    %149 = vector.broadcast %cst_82 : f32 to vector<8x128xf32>
    %150 = arith.mulf %149, %146 : vector<8x128xf32>
    %151 = arith.select %148, %146, %150 : vector<8x128xi1>, vector<8x128xf32>
    %c1168 = arith.constant 1168 : index
    %c0_83 = arith.constant 0 : index
    %152 = vector.load %arg1[%c1168, %c0_83] : memref<1536x128xf32, #tpu.memory_space<vmem>>, vector<8x8xf32>
    %cst_84 = arith.constant dense<0.000000e+00> : vector<8x128xf32>
    %153 = tpu.matmul %152, %140, %cst_84 {dimension_numbers = #tpu.dot_dimension_numbers<[1], [0], [0], [1], [0, 0, 1, 1], [], []>} : vector<8x8xf32>, vector<8x128xf32>, vector<8x128xf32> -> vector<8x128xf32>
    %c1216 = arith.constant 1216 : index
    %c0_85 = arith.constant 0 : index
    %154 = vector.load %arg1[%c1216, %c0_85] : memref<1536x128xf32, #tpu.memory_space<vmem>>, vector<128x128xf32>
    %cst_86 = arith.constant dense<0.000000e+00> : vector<8x128xf32>
    %155 = tpu.matmul %153, %154, %cst_86 {dimension_numbers = #tpu.dot_dimension_numbers<[1], [0], [0], [1], [0, 0, 1, 1], [], []>} : vector<8x128xf32>, vector<128x128xf32>, vector<8x128xf32> -> vector<8x128xf32>
    %c1176 = arith.constant 1176 : index
    %c0_87 = arith.constant 0 : index
    %156 = vector.load %arg1[%c1176, %c0_87] : memref<1536x128xf32, #tpu.memory_space<vmem>>, vector<8x8xf32>
    %cst_88 = arith.constant dense<0.000000e+00> : vector<8x128xf32>
    %157 = tpu.matmul %156, %151, %cst_88 {dimension_numbers = #tpu.dot_dimension_numbers<[1], [0], [0], [1], [0, 0, 1, 1], [], []>} : vector<8x8xf32>, vector<8x128xf32>, vector<8x128xf32> -> vector<8x128xf32>
    %c1344 = arith.constant 1344 : index
    %c0_89 = arith.constant 0 : index
    %158 = vector.load %arg1[%c1344, %c0_89] : memref<1536x128xf32, #tpu.memory_space<vmem>>, vector<128x128xf32>
    %cst_90 = arith.constant dense<0.000000e+00> : vector<8x128xf32>
    %159 = tpu.matmul %157, %158, %cst_90 {dimension_numbers = #tpu.dot_dimension_numbers<[1], [0], [0], [1], [0, 0, 1, 1], [], []>} : vector<8x128xf32>, vector<128x128xf32>, vector<8x128xf32> -> vector<8x128xf32>
    %c1472 = arith.constant 1472 : index
    %c0_91 = arith.constant 0 : index
    %160 = vector.load %arg1[%c1472, %c0_91] : memref<1536x128xf32, #tpu.memory_space<vmem>>, vector<12x8xf32>
    %cst_92 = arith.constant dense<0.000000e+00> : vector<12x128xf32>
    %161 = tpu.matmul %160, %155, %cst_92 {dimension_numbers = #tpu.dot_dimension_numbers<[1], [0], [0], [1], [0, 0, 1, 1], [], []>} : vector<12x8xf32>, vector<8x128xf32>, vector<12x128xf32> -> vector<12x128xf32>
    %c1504 = arith.constant 1504 : index
    %c0_93 = arith.constant 0 : index
    %162 = vector.load %arg1[%c1504, %c0_93] : memref<1536x128xf32, #tpu.memory_space<vmem>>, vector<12x128xf32>
    %163 = arith.addf %161, %162 : vector<12x128xf32>
    %c1488 = arith.constant 1488 : index
    %c0_94 = arith.constant 0 : index
    %164 = vector.load %arg1[%c1488, %c0_94] : memref<1536x128xf32, #tpu.memory_space<vmem>>, vector<12x8xf32>
    %cst_95 = arith.constant dense<0.000000e+00> : vector<12x128xf32>
    %165 = tpu.matmul %164, %159, %cst_95 {dimension_numbers = #tpu.dot_dimension_numbers<[1], [0], [0], [1], [0, 0, 1, 1], [], []>} : vector<12x8xf32>, vector<8x128xf32>, vector<12x128xf32> -> vector<12x128xf32>
    %c1520 = arith.constant 1520 : index
    %c0_96 = arith.constant 0 : index
    %166 = vector.load %arg1[%c1520, %c0_96] : memref<1536x128xf32, #tpu.memory_space<vmem>>, vector<12x128xf32>
    %167 = arith.addf %165, %166 : vector<12x128xf32>
    %cst_97 = arith.constant -1.000000e+30 : f32
    %168 = vector.broadcast %cst_97 : f32 to vector<12x128xf32>
    %169 = arith.select %2, %163, %168 : vector<12x128xi1>, vector<12x128xf32>
    %cst_98 = arith.constant dense<0xFF800000> : vector<12xf32>
    %170 = vector.multi_reduction <maximumf>, %169, %cst_98 [1] : vector<12x128xf32> to vector<12xf32>
    %171 = vector.shape_cast %170 : vector<12xf32> to vector<12x1xf32>
    %cst_99 = arith.constant -1.000000e+30 : f32
    %172 = vector.broadcast %cst_99 : f32 to vector<12x128xf32>
    %173 = arith.select %2, %172, %163 : vector<12x128xi1>, vector<12x128xf32>
    %cst_100 = arith.constant dense<0xFF800000> : vector<12xf32>
    %174 = vector.multi_reduction <maximumf>, %173, %cst_100 [1] : vector<12x128xf32> to vector<12xf32>
    %175 = vector.shape_cast %174 : vector<12xf32> to vector<12x1xf32>
    %176 = vector.shape_cast %171 : vector<12x1xf32> to vector<12x1xf32>
    %177 = vector.broadcast %176 : vector<12x1xf32> to vector<12x128xf32>
    %178 = vector.shape_cast %175 : vector<12x1xf32> to vector<12x1xf32>
    %179 = vector.broadcast %178 : vector<12x1xf32> to vector<12x128xf32>
    %180 = arith.select %2, %177, %179 : vector<12x128xi1>, vector<12x128xf32>
    %181 = arith.subf %163, %180 : vector<12x128xf32>
    %182 = math.exp %181 : vector<12x128xf32>
    %cst_101 = arith.constant 0.000000e+00 : f32
    %183 = vector.broadcast %cst_101 : f32 to vector<12x128xf32>
    %184 = arith.select %2, %182, %183 : vector<12x128xi1>, vector<12x128xf32>
    %cst_102 = arith.constant dense<0.000000e+00> : vector<12xf32>
    %185 = vector.multi_reduction <add>, %184, %cst_102 [1] : vector<12x128xf32> to vector<12xf32>
    %186 = vector.shape_cast %185 : vector<12xf32> to vector<12x1xf32>
    %cst_103 = arith.constant 0.000000e+00 : f32
    %187 = vector.broadcast %cst_103 : f32 to vector<12x128xf32>
    %188 = arith.select %2, %187, %182 : vector<12x128xi1>, vector<12x128xf32>
    %cst_104 = arith.constant dense<0.000000e+00> : vector<12xf32>
    %189 = vector.multi_reduction <add>, %188, %cst_104 [1] : vector<12x128xf32> to vector<12xf32>
    %190 = vector.shape_cast %189 : vector<12xf32> to vector<12x1xf32>
    %191 = vector.shape_cast %186 : vector<12x1xf32> to vector<12x1xf32>
    %192 = vector.broadcast %191 : vector<12x1xf32> to vector<12x128xf32>
    %193 = vector.shape_cast %190 : vector<12x1xf32> to vector<12x1xf32>
    %194 = vector.broadcast %193 : vector<12x1xf32> to vector<12x128xf32>
    %195 = arith.select %2, %192, %194 : vector<12x128xi1>, vector<12x128xf32>
    %196 = tpu.reciprocal %195 {approx = true} : vector<12x128xf32> -> vector<12x128xf32>
    %197 = arith.mulf %182, %196 : vector<12x128xf32>
    %198 = arith.mulf %197, %167 : vector<12x128xf32>
    %c160 = arith.constant 160 : index
    %c0_105 = arith.constant 0 : index
    %199 = vector.load %arg1[%c160, %c0_105] : memref<1536x128xf32, #tpu.memory_space<vmem>>, vector<128x128xf32>
    %cst_106 = arith.constant dense<0.000000e+00> : vector<12x128xf32>
    %200 = tpu.matmul %197, %199, %cst_106 {dimension_numbers = #tpu.dot_dimension_numbers<[1], [0], [0], [1], [0, 0, 1, 1], [], []>} : vector<12x128xf32>, vector<128x128xf32>, vector<12x128xf32> -> vector<12x128xf32>
    %c288 = arith.constant 288 : index
    %c0_107 = arith.constant 0 : index
    %201 = vector.load %arg1[%c288, %c0_107] : memref<1536x128xf32, #tpu.memory_space<vmem>>, vector<128x128xf32>
    %cst_108 = arith.constant dense<0.000000e+00> : vector<12x128xf32>
    %202 = tpu.matmul %198, %201, %cst_108 {dimension_numbers = #tpu.dot_dimension_numbers<[1], [0], [0], [1], [0, 0, 1, 1], [], []>} : vector<12x128xf32>, vector<128x128xf32>, vector<12x128xf32> -> vector<12x128xf32>
    %203 = arith.addf %200, %202 : vector<12x128xf32>
    %204 = tpu.concatenate %197, %198, %203 in 1 : vector<12x128xf32>, vector<12x128xf32>, vector<12x128xf32> -> vector<12x384xf32>
    %c0_109 = arith.constant 0 : index
    %c0_110 = arith.constant 0 : index
    %205 = vector.load %arg2[%c0_109, %c0_110] : memref<12x384xf32, #tpu.memory_space<vmem>>, vector<12x384xf32>
    tpu.vector_store %arg2[%c0_109, %c0_110], %204 {strides = array<i32>} : memref<12x384xf32, #tpu.memory_space<vmem>>, vector<12x384xf32>,
    return
  }
}

</mosaic_0001>

<llo_original>
// kernel: fwd.1
$region0: #{fwd.1}
  #allocation0 [shape = 'u32[]', space=smem, size = 0x4, offset = 0x4, fixed_abs, tag = 'smem constant byte address 0x4 - core index']
  #allocation1 [shape = 'u32[72,128]{1,0:T(1,128)}', space=vmem, size = 0x9000, scoped, tag = 'internal scratch']
  %s0 = inlined_call_operand.vmem [shape: f32[3,128], index: 0, kind: input, shape index: {}]
  %s1 = inlined_call_operand.vmem [shape: f32[1536,128], index: 1, kind: input, shape index: {}]
  %s2 = inlined_call_operand.vmem [shape: f32[12,384], index: 2, kind: output, shape index: {}]
  %s3 = sld [smem:[#allocation0]]
  $region18: #{fwd.1} parent=0
    _
  %s5 = ssub.s32 1, %s3
  %s6 = scalar_select 0, %s5, %s3
  // Predicated region
  $region2: #{fwd.1} parent=0 // pred_check
    _
  $region3: #{fwd.1} parent=0 // pred_check_branch
    %8 = sbr.rel (0) target = $region5
  $region4: #{fwd.1} parent=0 // pred_region
    _
  $region5: #{fwd.1} parent=0 // pred_fallthru
    _
  // Predicated region
  $region6: #{fwd.1} parent=0 // pred_check
    _
  $region7: #{fwd.1} parent=0 // pred_check_branch
    %10 = sbr.rel (0) target = $region9
  $region8: #{fwd.1} parent=0 // pred_region
    _
  $region9: #{fwd.1} parent=0 // pred_fallthru
    _
  %v11 = vlaneseq
  %v12 = vand.u32 %v11, 127
  %vm13 = vcmp.lt.s32.totalorder %v12, 64
  %v14 = vld [vmem:[%s1] sm:$0xff]
  %v15 = vld [vmem:[%s1 + $0x8] sm:$0xff]
  %v16 = vld [vmem:[%s0] sm:$0x7]
  %v17 = vld [vmem:[%s1 + $0x10] sm:$0xff]
  %v18 = vld [vmem:[%s1 + $0x18] sm:$0xff]
  %20 = vset.pattern.permute.xlu0 0
  %21 = vperm.xlu0 %20, %v17
  %v22 = vpop.permute.xlu0 %21
  %25 = vset.pattern.permute.xlu0 0
  %26 = vperm.xlu0 %25, %v18
  %v27 = vpop.permute.xlu0 %26
  %vm29 = vcmask 23552
  %v31 = vsel %vm29, %v14, 0
  %v34 = vsel %vm29, %v15, 0
  %vm36 = vcmask 1042432
  %v38 = vsel %vm36, %v16, 0
  %40 = vmatpush.msra.mxu0 0.0
  %41 = vmatpush.msra.mxu0 0.0
  %42 = vmatpush.msra.mxu0 0.0
  %43 = vmatpush.msra.mxu0 0.0
  %44 = vmatpush.msra.mxu0 0.0
  %45 = vmatpush.msra.mxu0 0.0
  %46 = vmatpush.msra.mxu0 0.0
  %47 = vmatpush.msra.mxu0 0.0
  %48 = vmatpush.msra.mxu0 0.0
  %49 = vmatpush.msra.mxu0 0.0
  %50 = vmatpush.msra.mxu0 0.0
  %51 = vmatpush.msra.mxu0 0.0
  %52 = vmatpush.msra.mxu0 0.0
  %53 = vmatpush.msra.mxu0 0.0
  %54 = vmatpush.msra.mxu0 0.0
  %55 = vmatpush.msra.mxu0 %v38
  %56 = vmatmul.f32.gmra.mxu0 %v31
  %v57 = vpop.f32.mrf.mxu0
  %v58 = vadd.f32 %v22, %v57
  %59 = vmatmul.f32.gmra.mxu0 %v34
  %v60 = vpop.f32.mrf.mxu0
  %v61 = vadd.f32 %v27, %v60
  %62 = vdwg.mxu0
  %v63 = vmax.f32 %v58, 0.0
  %v64 = vmax.f32 %v61, 0.0
  %v65 = vld [vmem:[%s1 + $0x20] sm:$0xff]
  %v66 = vld [vmem:[%s1 + $0x28] sm:$0xff]
  %v67 = vld [vmem:[%s1 + $0x30] sm:$0xff]
  %v68 = vld [vmem:[%s1 + $0x38] sm:$0xff]
  %v69 = vld [vmem:[%s1 + $0x40] sm:$0xff]
  %v70 = vld [vmem:[%s1 + $0x48] sm:$0xff]
  %v71 = vld [vmem:[%s1 + $0x50] sm:$0xff]
  %v72 = vld [vmem:[%s1 + $0x58] sm:$0xff]
  %v73 = vld [vmem:[%s1 + $0x60] sm:$0xff]
  %v74 = vld [vmem:[%s1 + $0x68] sm:$0xff]
  %v75 = vld [vmem:[%s1 + $0x70] sm:$0xff]
  %v76 = vld [vmem:[%s1 + $0x78] sm:$0xff]
  %v77 = vld [vmem:[%s1 + $0x80] sm:$0xff]
  %v78 = vld [vmem:[%s1 + $0x88] sm:$0xff]
  %v79 = vld [vmem:[%s1 + $0x90] sm:$0xff]
  %v80 = vld [vmem:[%s1 + $0x98] sm:$0xff]
  %81 = vmatpush.msra.mxu0 %v80
  %82 = vmatpush.msra.mxu0 %v79
  %83 = vmatpush.msra.mxu0 %v78
  %84 = vmatpush.msra.mxu0 %v77
  %85 = vmatpush.msra.mxu0 %v76
  %86 = vmatpush.msra.mxu0 %v75
  %87 = vmatpush.msra.mxu0 %v74
  %88 = vmatpush.msra.mxu0 %v73
  %89 = vmatpush.msra.mxu0 %v72
  %90 = vmatpush.msra.mxu0 %v71
  %91 = vmatpush.msra.mxu0 %v70
  %92 = vmatpush.msra.mxu0 %v69
  %93 = vmatpush.msra.mxu0 %v68
  %94 = vmatpush.msra.mxu0 %v67
  %95 = vmatpush.msra.mxu0 %v66
  %96 = vmatpush.msra.mxu0 %v65
  %97 = vmatmul.f32.gmra.mxu0 %v63
  %v98 = vpop.f32.mrf.mxu0
  %v99 = vadd.f32 0.0, %v98
  %100 = vmatmul.f32.gmra.mxu0 %v64
  %v101 = vpop.f32.mrf.mxu0
  %v102 = vadd.f32 0.0, %v101
  %103 = vdwg.mxu0
  %v104 = vld [vmem:[%s1 + $0x1a0] sm:$0xff]
  %v105 = vld [vmem:[%s1 + $0x1a8] sm:$0xff]
  %v106 = vld [vmem:[%s1 + $0x1b0] sm:$0xff]
  %v107 = vld [vmem:[%s1 + $0x1b8] sm:$0xff]
  %v108 = vld [vmem:[%s1 + $0x1c0] sm:$0xff]
  %v109 = vld [vmem:[%s1 + $0x1c8] sm:$0xff]
  %v110 = vld [vmem:[%s1 + $0x1d0] sm:$0xff]
  %v111 = vld [vmem:[%s1 + $0x1d8] sm:$0xff]
  %v112 = vld [vmem:[%s1 + $0x1e0] sm:$0xff]
  %v113 = vld [vmem:[%s1 + $0x1e8] sm:$0xff]
  %v114 = vld [vmem:[%s1 + $0x1f0] sm:$0xff]
  %v115 = vld [vmem:[%s1 + $0x1f8] sm:$0xff]
  %v116 = vld [vmem:[%s1 + $0x200] sm:$0xff]
  %v117 = vld [vmem:[%s1 + $0x208] sm:$0xff]
  %v118 = vld [vmem:[%s1 + $0x210] sm:$0xff]
  %v119 = vld [vmem:[%s1 + $0x218] sm:$0xff]
  %121 = vset.pattern.permute.xlu0 0
  %122 = vperm.xlu0 %121, %v112
  %v123 = vpop.permute.xlu0 %122
  %126 = vset.pattern.permute.xlu0 0
  %127 = vperm.xlu0 %126, %v113
  %v128 = vpop.permute.xlu0 %127
  %131 = vset.pattern.permute.xlu0 0
  %132 = vperm.xlu0 %131, %v114
  %v133 = vpop.permute.xlu0 %132
  %136 = vset.pattern.permute.xlu0 0
  %137 = vperm.xlu0 %136, %v115
  %v138 = vpop.permute.xlu0 %137
  %141 = vset.pattern.permute.xlu0 0
  %142 = vperm.xlu0 %141, %v116
  %v143 = vpop.permute.xlu0 %142
  %146 = vset.pattern.permute.xlu0 0
  %147 = vperm.xlu0 %146, %v117
  %v148 = vpop.permute.xlu0 %147
  %151 = vset.pattern.permute.xlu0 0
  %152 = vperm.xlu0 %151, %v118
  %v153 = vpop.permute.xlu0 %152
  %156 = vset.pattern.permute.xlu0 0
  %157 = vperm.xlu0 %156, %v119
  %v158 = vpop.permute.xlu0 %157
  %vm160 = vcmask 130048
  %v162 = vsel %vm160, %v104, 0
  %v165 = vsel %vm160, %v105, 0
  %v168 = vsel %vm160, %v106, 0
  %v171 = vsel %vm160, %v107, 0
  %v174 = vsel %vm160, %v108, 0
  %v177 = vsel %vm160, %v109, 0
  %v180 = vsel %vm160, %v110, 0
  %v183 = vsel %vm160, %v111, 0
  %185 = vmatpush.msra.mxu0 0.0
  %186 = vmatpush.msra.mxu0 0.0
  %187 = vmatpush.msra.mxu0 0.0
  %188 = vmatpush.msra.mxu0 0.0
  %189 = vmatpush.msra.mxu0 0.0
  %190 = vmatpush.msra.mxu0 0.0
  %191 = vmatpush.msra.mxu0 0.0
  %192 = vmatpush.msra.mxu0 0.0
  %193 = vmatpush.msra.mxu0 0.0
  %194 = vmatpush.msra.mxu0 0.0
  %195 = vmatpush.msra.mxu0 0.0
  %196 = vmatpush.msra.mxu0 0.0
  %197 = vmatpush.msra.mxu0 0.0
  %198 = vmatpush.msra.mxu0 0.0
  %199 = vmatpush.msra.mxu0 %v102
  %200 = vmatpush.msra.mxu0 %v99
  %201 = vmatmul.f32.gmra.mxu0 %v162
  %v202 = vpop.f32.mrf.mxu0
  %v203 = vadd.f32 %v123, %v202
  %204 = vmatmul.f32.gmra.mxu0 %v165
  %v205 = vpop.f32.mrf.mxu0
  %v206 = vadd.f32 %v128, %v205
  %207 = vmatmul.f32.gmra.mxu0 %v168
  %v208 = vpop.f32.mrf.mxu0
  %v209 = vadd.f32 %v133, %v208
  %210 = vmatmul.f32.gmra.mxu0 %v171
  %v211 = vpop.f32.mrf.mxu0
  %v212 = vadd.f32 %v138, %v211
  %213 = vmatmul.f32.gmra.mxu0 %v174
  %v214 = vpop.f32.mrf.mxu0
  %v215 = vadd.f32 %v143, %v214
  %216 = vmatmul.f32.gmra.mxu0 %v177
  %v217 = vpop.f32.mrf.mxu0
  %v218 = vadd.f32 %v148, %v217
  %219 = vmatmul.f32.gmra.mxu0 %v180
  %v220 = vpop.f32.mrf.mxu0
  %v221 = vadd.f32 %v153, %v220
  %222 = vmatmul.f32.gmra.mxu0 %v183
  %v223 = vpop.f32.mrf.mxu0
  %v224 = vadd.f32 %v158, %v223
  %225 = vdwg.mxu0
  %v226 = vmax.f32 %v203, 0.0
  %v227 = vmax.f32 %v206, 0.0
  %v228 = vmax.f32 %v209, 0.0
  %v229 = vmax.f32 %v212, 0.0
  %v230 = vmax.f32 %v215, 0.0
  %v231 = vmax.f32 %v218, 0.0
  %v232 = vmax.f32 %v221, 0.0
  %v233 = vmax.f32 %v224, 0.0
  %v234 = vld [vmem:[%s1 + $0x220] sm:$0xff]
  %v235 = vld [vmem:[%s1 + $0x228] sm:$0xff]
  %237 = vset.pattern.permute.xlu0 0
  %238 = vperm.xlu0 %237, %v235
  %v239 = vpop.permute.xlu0 %238
  %vm241 = vcmask 523264
  %v243 = vsel %vm241, %v234, 0
  %245 = vmatpush.msra.mxu0 0.0
  %246 = vmatpush.msra.mxu0 0.0
  %247 = vmatpush.msra.mxu0 0.0
  %248 = vmatpush.msra.mxu0 0.0
  %249 = vmatpush.msra.mxu0 0.0
  %250 = vmatpush.msra.mxu0 0.0
  %251 = vmatpush.msra.mxu0 0.0
  %252 = vmatpush.msra.mxu0 0.0
  %253 = vmatpush.msra.mxu0 %v233
  %254 = vmatpush.msra.mxu0 %v232
  %255 = vmatpush.msra.mxu0 %v231
  %256 = vmatpush.msra.mxu0 %v230
  %257 = vmatpush.msra.mxu0 %v229
  %258 = vmatpush.msra.mxu0 %v228
  %259 = vmatpush.msra.mxu0 %v227
  %260 = vmatpush.msra.mxu0 %v226
  %261 = vmatmul.f32.gmra.mxu0 %v243
  %v262 = vpop.f32.mrf.mxu0
  %v263 = vadd.f32 %v239, %v262
  %264 = vdwg.mxu0
  %vm265 = vcmp.ge.f32.partialorder %v263, 0.0
  %v266 = vmul.f32 %v263, 0.1
  %v267 = vsel %vm265, %v263, %v266
  %v268 = vld [vmem:[%s1 + $0x230] sm:$0xff]
  %vm269 = vcmask 64512
  %v271 = vsel %vm269, %v268, 0
  %273 = vmatpush.msra.mxu0 0.0
  %274 = vmatpush.msra.mxu0 0.0
  %275 = vmatpush.msra.mxu0 0.0
  %276 = vmatpush.msra.mxu0 0.0
  %277 = vmatpush.msra.mxu0 0.0
  %278 = vmatpush.msra.mxu0 0.0
  %279 = vmatpush.msra.mxu0 0.0
  %280 = vmatpush.msra.mxu0 0.0
  %281 = vmatpush.msra.mxu0 0.0
  %282 = vmatpush.msra.mxu0 0.0
  %283 = vmatpush.msra.mxu0 0.0
  %284 = vmatpush.msra.mxu0 0.0
  %285 = vmatpush.msra.mxu0 0.0
  %286 = vmatpush.msra.mxu0 0.0
  %287 = vmatpush.msra.mxu0 0.0
  %288 = vmatpush.msra.mxu0 %v267
  %289 = vmatmul.f32.gmra.mxu0 %v271
  %v290 = vpop.f32.mrf.mxu0
  %v291 = vadd.f32 0.0, %v290
  %292 = vdwg.mxu0
  %v293 = vld [vmem:[%s1 + $0x250] sm:$0xff]
  %v294 = vld [vmem:[%s1 + $0x258] sm:$0xff]
  %v296 = vsel %vm269, %v291, 0
  %298 = vmatpush.msra.mxu0 0.0
  %299 = vmatpush.msra.mxu0 0.0
  %300 = vmatpush.msra.mxu0 0.0
  %301 = vmatpush.msra.mxu0 0.0
  %302 = vmatpush.msra.mxu0 0.0
  %303 = vmatpush.msra.mxu0 0.0
  %304 = vmatpush.msra.mxu0 0.0
  %305 = vmatpush.msra.mxu0 0.0
  %306 = vmatpush.msra.mxu0 0.0
  %307 = vmatpush.msra.mxu0 0.0
  %308 = vmatpush.msra.mxu0 0.0
  %309 = vmatpush.msra.mxu0 0.0
  %310 = vmatpush.msra.mxu0 0.0
  %311 = vmatpush.msra.mxu0 0.0
  %312 = vmatpush.msra.mxu0 0.0
  %313 = vmatpush.msra.mxu0 %v293
  %314 = vmatmul.f32.gmra.mxu0 %v296
  %v315 = vpop.f32.mrf.mxu0
  %v316 = vadd.f32 %v294, %v315
  %317 = vdwg.mxu0
  %vm318 = vcmp.ge.f32.partialorder %v316, 0.0
  %v319 = vmul.f32 %v316, 0.1
  %v320 = vsel %vm318, %v316, %v319
  %v321 = vld [vmem:[%s1 + $0x238] sm:$0xff]
  %v323 = vsel %vm269, %v321, 0
  %325 = vmatpush.msra.mxu0 0.0
  %326 = vmatpush.msra.mxu0 0.0
  %327 = vmatpush.msra.mxu0 0.0
  %328 = vmatpush.msra.mxu0 0.0
  %329 = vmatpush.msra.mxu0 0.0
  %330 = vmatpush.msra.mxu0 0.0
  %331 = vmatpush.msra.mxu0 0.0
  %332 = vmatpush.msra.mxu0 0.0
  %333 = vmatpush.msra.mxu0 0.0
  %334 = vmatpush.msra.mxu0 0.0
  %335 = vmatpush.msra.mxu0 0.0
  %336 = vmatpush.msra.mxu0 0.0
  %337 = vmatpush.msra.mxu0 0.0
  %338 = vmatpush.msra.mxu0 0.0
  %339 = vmatpush.msra.mxu0 0.0
  %340 = vmatpush.msra.mxu0 %v267
  %341 = vmatmul.f32.gmra.mxu0 %v323
  %v342 = vpop.f32.mrf.mxu0
  %v343 = vadd.f32 0.0, %v342
  %344 = vdwg.mxu0
  %v345 = vld [vmem:[%s1 + $0x260] sm:$0xff]
  %v346 = vld [vmem:[%s1 + $0x268] sm:$0xff]
  %v348 = vsel %vm269, %v343, 0
  %350 = vmatpush.msra.mxu0 0.0
  %351 = vmatpush.msra.mxu0 0.0
  %352 = vmatpush.msra.mxu0 0.0
  %353 = vmatpush.msra.mxu0 0.0
  %354 = vmatpush.msra.mxu0 0.0
  %355 = vmatpush.msra.mxu0 0.0
  %356 = vmatpush.msra.mxu0 0.0
  %357 = vmatpush.msra.mxu0 0.0
  %358 = vmatpush.msra.mxu0 0.0
  %359 = vmatpush.msra.mxu0 0.0
  %360 = vmatpush.msra.mxu0 0.0
  %361 = vmatpush.msra.mxu0 0.0
  %362 = vmatpush.msra.mxu0 0.0
  %363 = vmatpush.msra.mxu0 0.0
  %364 = vmatpush.msra.mxu0 0.0
  %365 = vmatpush.msra.mxu0 %v345
  %366 = vmatmul.f32.gmra.mxu0 %v348
  %v367 = vpop.f32.mrf.mxu0
  %v368 = vadd.f32 %v346, %v367
  %369 = vdwg.mxu0
  %vm370 = vcmp.ge.f32.partialorder %v368, 0.0
  %v371 = vmul.f32 %v368, 0.1
  %v372 = vsel %vm370, %v368, %v371
  %v373 = vld [vmem:[%s1 + $0x240] sm:$0xff]
  %v375 = vsel %vm269, %v373, 0
  %377 = vmatpush.msra.mxu0 0.0
  %378 = vmatpush.msra.mxu0 0.0
  %379 = vmatpush.msra.mxu0 0.0
  %380 = vmatpush.msra.mxu0 0.0
  %381 = vmatpush.msra.mxu0 0.0
  %382 = vmatpush.msra.mxu0 0.0
  %383 = vmatpush.msra.mxu0 0.0
  %384 = vmatpush.msra.mxu0 0.0
  %385 = vmatpush.msra.mxu0 0.0
  %386 = vmatpush.msra.mxu0 0.0
  %387 = vmatpush.msra.mxu0 0.0
  %388 = vmatpush.msra.mxu0 0.0
  %389 = vmatpush.msra.mxu0 0.0
  %390 = vmatpush.msra.mxu0 0.0
  %391 = vmatpush.msra.mxu0 0.0
  %392 = vmatpush.msra.mxu0 %v320
  %393 = vmatmul.f32.gmra.mxu0 %v375
  %v394 = vpop.f32.mrf.mxu0
  %v395 = vadd.f32 0.0, %v394
  %396 = vdwg.mxu0
  %v397 = vld [vmem:[%s1 + $0x270] sm:$0xff]
  %v398 = vld [vmem:[%s1 + $0x278] sm:$0xff]
  %v399 = vld [vmem:[%s1 + $0x280] sm:$0xff]
  %v400 = vld [vmem:[%s1 + $0x288] sm:$0xff]
  %v401 = vld [vmem:[%s1 + $0x290] sm:$0xff]
  %v402 = vld [vmem:[%s1 + $0x298] sm:$0xff]
  %v403 = vld [vmem:[%s1 + $0x2a0] sm:$0xff]
  %v404 = vld [vmem:[%s1 + $0x2a8] sm:$0xff]
  %v405 = vld [vmem:[%s1 + $0x2b0] sm:$0xff]
  %v406 = vld [vmem:[%s1 + $0x2b8] sm:$0xff]
  %v407 = vld [vmem:[%s1 + $0x2c0] sm:$0xff]
  %v408 = vld [vmem:[%s1 + $0x2c8] sm:$0xff]
  %v409 = vld [vmem:[%s1 + $0x2d0] sm:$0xff]
  %v410 = vld [vmem:[%s1 + $0x2d8] sm:$0xff]
  %v411 = vld [vmem:[%s1 + $0x2e0] sm:$0xff]
  %v412 = vld [vmem:[%s1 + $0x2e8] sm:$0xff]
  %413 = vmatpush.msra.mxu0 %v412
  %414 = vmatpush.msra.mxu0 %v411
  %415 = vmatpush.msra.mxu0 %v410
  %416 = vmatpush.msra.mxu0 %v409
  %417 = vmatpush.msra.mxu0 %v408
  %418 = vmatpush.msra.mxu0 %v407
  %419 = vmatpush.msra.mxu0 %v406
  %420 = vmatpush.msra.mxu0 %v405
  %421 = vmatpush.msra.mxu0 %v404
  %422 = vmatpush.msra.mxu0 %v403
  %423 = vmatpush.msra.mxu0 %v402
  %424 = vmatpush.msra.mxu0 %v401
  %425 = vmatpush.msra.mxu0 %v400
  %426 = vmatpush.msra.mxu0 %v399
  %427 = vmatpush.msra.mxu0 %v398
  %428 = vmatpush.msra.mxu0 %v397
  %429 = vmatmul.f32.gmra.mxu0 %v395
  %v430 = vpop.f32.mrf.mxu0
  %v431 = vadd.f32 0.0, %v430
  %432 = vdwg.mxu0
  %v433 = vld [vmem:[%s1 + $0x248] sm:$0xff]
  %v435 = vsel %vm269, %v433, 0
  %437 = vmatpush.msra.mxu0 0.0
  %438 = vmatpush.msra.mxu0 0.0
  %439 = vmatpush.msra.mxu0 0.0
  %440 = vmatpush.msra.mxu0 0.0
  %441 = vmatpush.msra.mxu0 0.0
  %442 = vmatpush.msra.mxu0 0.0
  %443 = vmatpush.msra.mxu0 0.0
  %444 = vmatpush.msra.mxu0 0.0
  %445 = vmatpush.msra.mxu0 0.0
  %446 = vmatpush.msra.mxu0 0.0
  %447 = vmatpush.msra.mxu0 0.0
  %448 = vmatpush.msra.mxu0 0.0
  %449 = vmatpush.msra.mxu0 0.0
  %450 = vmatpush.msra.mxu0 0.0
  %451 = vmatpush.msra.mxu0 0.0
  %452 = vmatpush.msra.mxu0 %v372
  %453 = vmatmul.f32.gmra.mxu0 %v435
  %v454 = vpop.f32.mrf.mxu0
  %v455 = vadd.f32 0.0, %v454
  %456 = vdwg.mxu0
  %v457 = vld [vmem:[%s1 + $0x2f0] sm:$0xff]
  %v458 = vld [vmem:[%s1 + $0x2f8] sm:$0xff]
  %v459 = vld [vmem:[%s1 + $0x300] sm:$0xff]
  %v460 = vld [vmem:[%s1 + $0x308] sm:$0xff]
  %v461 = vld [vmem:[%s1 + $0x310] sm:$0xff]
  %v462 = vld [vmem:[%s1 + $0x318] sm:$0xff]
  %v463 = vld [vmem:[%s1 + $0x320] sm:$0xff]
  %v464 = vld [vmem:[%s1 + $0x328] sm:$0xff]
  %v465 = vld [vmem:[%s1 + $0x330] sm:$0xff]
  %v466 = vld [vmem:[%s1 + $0x338] sm:$0xff]
  %v467 = vld [vmem:[%s1 + $0x340] sm:$0xff]
  %v468 = vld [vmem:[%s1 + $0x348] sm:$0xff]
  %v469 = vld [vmem:[%s1 + $0x350] sm:$0xff]
  %v470 = vld [vmem:[%s1 + $0x358] sm:$0xff]
  %v471 = vld [vmem:[%s1 + $0x360] sm:$0xff]
  %v472 = vld [vmem:[%s1 + $0x368] sm:$0xff]
  %473 = vmatpush.msra.mxu0 %v472
  %474 = vmatpush.msra.mxu0 %v471
  %475 = vmatpush.msra.mxu0 %v470
  %476 = vmatpush.msra.mxu0 %v469
  %477 = vmatpush.msra.mxu0 %v468
  %478 = vmatpush.msra.mxu0 %v467
  %479 = vmatpush.msra.mxu0 %v466
  %480 = vmatpush.msra.mxu0 %v465
  %481 = vmatpush.msra.mxu0 %v464
  %482 = vmatpush.msra.mxu0 %v463
  %483 = vmatpush.msra.mxu0 %v462
  %484 = vmatpush.msra.mxu0 %v461
  %485 = vmatpush.msra.mxu0 %v460
  %486 = vmatpush.msra.mxu0 %v459
  %487 = vmatpush.msra.mxu0 %v458
  %488 = vmatpush.msra.mxu0 %v457
  %489 = vmatmul.f32.gmra.mxu0 %v455
  %v490 = vpop.f32.mrf.mxu0
  %v491 = vadd.f32 0.0, %v490
  %492 = vdwg.mxu0
  %v493 = vld [vmem:[%s1 + $0x370] sm:$0xff]
  %v494 = vld [vmem:[%s1 + $0x378] sm:$0xf]
  %v495 = vld [vmem:[%s1 + $0x398] sm:$0xf]
  %v497 = vsel %vm269, %v493, 0
  %v500 = vsel %vm269, %v494, 0
  %502 = vmatpush.msra.mxu0 0.0
  %503 = vmatpush.msra.mxu0 0.0
  %504 = vmatpush.msra.mxu0 0.0
  %505 = vmatpush.msra.mxu0 0.0
  %506 = vmatpush.msra.mxu0 0.0
  %507 = vmatpush.msra.mxu0 0.0
  %508 = vmatpush.msra.mxu0 0.0
  %509 = vmatpush.msra.mxu0 0.0
  %510 = vmatpush.msra.mxu0 0.0
  %511 = vmatpush.msra.mxu0 0.0
  %512 = vmatpush.msra.mxu0 0.0
  %513 = vmatpush.msra.mxu0 0.0
  %514 = vmatpush.msra.mxu0 0.0
  %515 = vmatpush.msra.mxu0 0.0
  %516 = vmatpush.msra.mxu0 0.0
  %517 = vmatpush.msra.mxu0 %v431
  %518 = vmatmul.f32.gmra.mxu0 %v497
  %v519 = vpop.f32.mrf.mxu0
  %520 = vmatmul.f32.gmra.mxu0 %v500
  %v521 = vpop.f32.mrf.mxu0
  %v522 = vadd.f32 %v495, %v521
  %523 = vdwg.mxu0
  %v524 = vld [vmem:[%s1 + $0x380] sm:$0xff]
  %v525 = vld [vmem:[%s1 + $0x388] sm:$0xf]
  %v526 = vld [vmem:[%s1 + $0x3a8] sm:$0xf]
  %v528 = vsel %vm269, %v524, 0
  %v531 = vsel %vm269, %v525, 0
  %533 = vmatpush.msra.mxu0 0.0
  %534 = vmatpush.msra.mxu0 0.0
  %535 = vmatpush.msra.mxu0 0.0
  %536 = vmatpush.msra.mxu0 0.0
  %537 = vmatpush.msra.mxu0 0.0
  %538 = vmatpush.msra.mxu0 0.0
  %539 = vmatpush.msra.mxu0 0.0
  %540 = vmatpush.msra.mxu0 0.0
  %541 = vmatpush.msra.mxu0 0.0
  %542 = vmatpush.msra.mxu0 0.0
  %543 = vmatpush.msra.mxu0 0.0
  %544 = vmatpush.msra.mxu0 0.0
  %545 = vmatpush.msra.mxu0 0.0
  %546 = vmatpush.msra.mxu0 0.0
  %547 = vmatpush.msra.mxu0 0.0
  %548 = vmatpush.msra.mxu0 %v491
  %549 = vmatmul.f32.gmra.mxu0 %v528
  %v550 = vpop.f32.mrf.mxu0
  %551 = vmatmul.f32.gmra.mxu0 %v531
  %v552 = vpop.f32.mrf.mxu0
  %v553 = vadd.f32 %v526, %v552
  %554 = vdwg.mxu0
  %v555 = vsel %vm13, %v522, -1e+30
  %vm556 = vcmask 1043456
  %v557 = vsel %vm556, %v555, -inf
  %558 = vmax.xlane.f32.xlu0 %v557
  %v559 = vpop.xlane.xlu0 %558
  %v560 = vsel %vm13, -1e+30, %v522
  %v561 = vsel %vm556, %v560, -inf
  %562 = vmax.xlane.f32.xlu0 %v561
  %v563 = vpop.xlane.xlu0 %562
  %v564 = vsel %vm13, %v559, %v563
  %v565 = vsub.f32 %v522, %v564
  %v566 = vmul.f32 %v565, 1.442695
  %v567 = vpow.pop %v566
  %v568 = vsel %vm13, %v567, 0.0
  %v569 = vsel %vm556, %v568, 0.0
  %570 = vadd.xlane.f32.xlu0 %v569
  %v571 = vpop.xlane.xlu0 %570
  %v572 = vsel %vm13, 0.0, %v567
  %v573 = vsel %vm556, %v572, 0.0
  %574 = vadd.xlane.f32.xlu0 %v573
  %v575 = vpop.xlane.xlu0 %574
  %v576 = vsel %vm13, %v571, %v575
  %v577 = vrcp.pop %v576
  %v578 = vmul.f32 %v567, %v577
  %v579 = vmul.f32 %v578, %v553
  %v580 = vld [vmem:[%s1 + $0x3b0] sm:$0xff]
  %v581 = vld [vmem:[%s1 + $0x3b8] sm:$0xff]
  %v582 = vld [vmem:[%s1 + $0x3c0] sm:$0xff]
  %v583 = vld [vmem:[%s1 + $0x3c8] sm:$0xff]
  %vm584 = vcmask 31744
  %v586 = vsel %vm584, %v582, 0
  %v589 = vsel %vm584, %v583, 0
  %v592 = vsel %vm556, %v578, 0
  %594 = vmatpush.msra.mxu0 0.0
  %595 = vmatpush.msra.mxu0 0.0
  %596 = vmatpush.msra.mxu0 0.0
  %597 = vmatpush.msra.mxu0 0.0
  %598 = vmatpush.msra.mxu0 0.0
  %599 = vmatpush.msra.mxu0 0.0
  %600 = vmatpush.msra.mxu0 0.0
  %601 = vmatpush.msra.mxu0 0.0
  %602 = vmatpush.msra.mxu0 0.0
  %603 = vmatpush.msra.mxu0 0.0
  %604 = vmatpush.msra.mxu0 0.0
  %605 = vmatpush.msra.mxu0 0.0
  %606 = vmatpush.msra.mxu0 0.0
  %607 = vmatpush.msra.mxu0 0.0
  %608 = vmatpush.msra.mxu0 0.0
  %609 = vmatpush.msra.mxu0 %v592
  %610 = vmatmul.f32.gmra.mxu0 %v586
  %v611 = vpop.f32.mrf.mxu0
  %v612 = vadd.f32 0.0, %v611
  %613 = vmatmul.f32.gmra.mxu0 %v589
  %v614 = vpop.f32.mrf.mxu0
  %v615 = vadd.f32 0.0, %v614
  %616 = vdwg.mxu0
  %v618 = vsel %vm160, %v580, 0
  %v621 = vsel %vm160, %v581, 0
  %623 = vmatpush.msra.mxu0 0.0
  %624 = vmatpush.msra.mxu0 0.0
  %625 = vmatpush.msra.mxu0 0.0
  %626 = vmatpush.msra.mxu0 0.0
  %627 = vmatpush.msra.mxu0 0.0
  %628 = vmatpush.msra.mxu0 0.0
  %629 = vmatpush.msra.mxu0 0.0
  %630 = vmatpush.msra.mxu0 0.0
  %631 = vmatpush.msra.mxu0 0.0
  %632 = vmatpush.msra.mxu0 0.0
  %633 = vmatpush.msra.mxu0 0.0
  %634 = vmatpush.msra.mxu0 0.0
  %635 = vmatpush.msra.mxu0 0.0
  %636 = vmatpush.msra.mxu0 0.0
  %637 = vmatpush.msra.mxu0 %v64
  %638 = vmatpush.msra.mxu0 %v63
  %639 = vmatmul.f32.gmra.mxu0 %v618
  %v640 = vpop.f32.mrf.mxu0
  %v641 = vadd.f32 %v612, %v640
  %642 = vmatmul.f32.gmra.mxu0 %v621
  %v643 = vpop.f32.mrf.mxu0
  %v644 = vadd.f32 %v615, %v643
  %645 = vdwg.mxu0
  %v646 = vld [vmem:[%s1 + $0x3d0] sm:$0xff]
  %v647 = vld [vmem:[%s1 + $0x3d8] sm:$0xff]
  %v649 = vsel %vm584, %v646, 0
  %v652 = vsel %vm584, %v647, 0
  %v655 = vsel %vm556, %v579, 0
  %657 = vmatpush.msra.mxu0 0.0
  %658 = vmatpush.msra.mxu0 0.0
  %659 = vmatpush.msra.mxu0 0.0
  %660 = vmatpush.msra.mxu0 0.0
  %661 = vmatpush.msra.mxu0 0.0
  %662 = vmatpush.msra.mxu0 0.0
  %663 = vmatpush.msra.mxu0 0.0
  %664 = vmatpush.msra.mxu0 0.0
  %665 = vmatpush.msra.mxu0 0.0
  %666 = vmatpush.msra.mxu0 0.0
  %667 = vmatpush.msra.mxu0 0.0
  %668 = vmatpush.msra.mxu0 0.0
  %669 = vmatpush.msra.mxu0 0.0
  %670 = vmatpush.msra.mxu0 0.0
  %671 = vmatpush.msra.mxu0 0.0
  %672 = vmatpush.msra.mxu0 %v655
  %673 = vmatmul.f32.gmra.mxu0 %v649
  %v674 = vpop.f32.mrf.mxu0
  %v675 = vadd.f32 0.0, %v674
  %676 = vmatmul.f32.gmra.mxu0 %v652
  %v677 = vpop.f32.mrf.mxu0
  %v678 = vadd.f32 0.0, %v677
  %679 = vdwg.mxu0
  %v680 = vadd.f32 %v641, %v675
  %v681 = vadd.f32 %v644, %v678
  %v682 = vld [vmem:[%s1 + $0x3e0] sm:$0xff]
  %v683 = vld [vmem:[%s1 + $0x3e8] sm:$0xff]
  %685 = vset.pattern.permute.xlu0 0
  %686 = vperm.xlu0 %685, %v682
  %v687 = vpop.permute.xlu0 %686
  %690 = vset.pattern.permute.xlu0 0
  %691 = vperm.xlu0 %690, %v683
  %v692 = vpop.permute.xlu0 %691
  %v694 = vadd.f32 %v680, %v687
  %v695 = vadd.f32 %v681, %v692
  %696 = vmatpush.msra.mxu0 %v80
  %697 = vmatpush.msra.mxu0 %v79
  %698 = vmatpush.msra.mxu0 %v78
  %699 = vmatpush.msra.mxu0 %v77
  %700 = vmatpush.msra.mxu0 %v76
  %701 = vmatpush.msra.mxu0 %v75
  %702 = vmatpush.msra.mxu0 %v74
  %703 = vmatpush.msra.mxu0 %v73
  %704 = vmatpush.msra.mxu0 %v72
  %705 = vmatpush.msra.mxu0 %v71
  %706 = vmatpush.msra.mxu0 %v70
  %707 = vmatpush.msra.mxu0 %v69
  %708 = vmatpush.msra.mxu0 %v68
  %709 = vmatpush.msra.mxu0 %v67
  %710 = vmatpush.msra.mxu0 %v66
  %711 = vmatpush.msra.mxu0 %v65
  %712 = vmatmul.f32.gmra.mxu0 %v694
  %v713 = vpop.f32.mrf.mxu0
  %v714 = vadd.f32 0.0, %v713
  %715 = vmatmul.f32.gmra.mxu0 %v695
  %v716 = vpop.f32.mrf.mxu0
  %v717 = vadd.f32 0.0, %v716
  %718 = vdwg.mxu0
  %v719 = vld [vmem:[%s1 + $0x3f0] sm:$0xff]
  %v720 = vld [vmem:[%s1 + $0x3f8] sm:$0xff]
  %v721 = vld [vmem:[%s1 + $0x400] sm:$0xff]
  %v722 = vld [vmem:[%s1 + $0x408] sm:$0xff]
  %v723 = vld [vmem:[%s1 + $0x410] sm:$0xff]
  %v724 = vld [vmem:[%s1 + $0x418] sm:$0xff]
  %v725 = vld [vmem:[%s1 + $0x420] sm:$0xff]
  %v726 = vld [vmem:[%s1 + $0x428] sm:$0xff]
  %v727 = vld [vmem:[%s1 + $0x430] sm:$0xff]
  %v728 = vld [vmem:[%s1 + $0x438] sm:$0xff]
  %v729 = vld [vmem:[%s1 + $0x440] sm:$0xff]
  %v730 = vld [vmem:[%s1 + $0x448] sm:$0xff]
  %v731 = vld [vmem:[%s1 + $0x450] sm:$0xff]
  %v732 = vld [vmem:[%s1 + $0x458] sm:$0xff]
  %v733 = vld [vmem:[%s1 + $0x460] sm:$0xff]
  %v734 = vld [vmem:[%s1 + $0x468] sm:$0xff]
  %736 = vset.pattern.permute.xlu0 0
  %737 = vperm.xlu0 %736, %v727
  %v738 = vpop.permute.xlu0 %737
  %741 = vset.pattern.permute.xlu0 0
  %742 = vperm.xlu0 %741, %v728
  %v743 = vpop.permute.xlu0 %742
  %746 = vset.pattern.permute.xlu0 0
  %747 = vperm.xlu0 %746, %v729
  %v748 = vpop.permute.xlu0 %747
  %751 = vset.pattern.permute.xlu0 0
  %752 = vperm.xlu0 %751, %v730
  %v753 = vpop.permute.xlu0 %752
  %756 = vset.pattern.permute.xlu0 0
  %757 = vperm.xlu0 %756, %v731
  %v758 = vpop.permute.xlu0 %757
  %761 = vset.pattern.permute.xlu0 0
  %762 = vperm.xlu0 %761, %v732
  %v763 = vpop.permute.xlu0 %762
  %766 = vset.pattern.permute.xlu0 0
  %767 = vperm.xlu0 %766, %v733
  %v768 = vpop.permute.xlu0 %767
  %771 = vset.pattern.permute.xlu0 0
  %772 = vperm.xlu0 %771, %v734
  %v773 = vpop.permute.xlu0 %772
  %v776 = vsel %vm160, %v719, 0
  %v779 = vsel %vm160, %v720, 0
  %v782 = vsel %vm160, %v721, 0
  %v785 = vsel %vm160, %v722, 0
  %v788 = vsel %vm160, %v723, 0
  %v791 = vsel %vm160, %v724, 0
  %v794 = vsel %vm160, %v725, 0
  %v797 = vsel %vm160, %v726, 0
  %799 = vmatpush.msra.mxu0 0.0
  %800 = vmatpush.msra.mxu0 0.0
  %801 = vmatpush.msra.mxu0 0.0
  %802 = vmatpush.msra.mxu0 0.0
  %803 = vmatpush.msra.mxu0 0.0
  %804 = vmatpush.msra.mxu0 0.0
  %805 = vmatpush.msra.mxu0 0.0
  %806 = vmatpush.msra.mxu0 0.0
  %807 = vmatpush.msra.mxu0 0.0
  %808 = vmatpush.msra.mxu0 0.0
  %809 = vmatpush.msra.mxu0 0.0
  %810 = vmatpush.msra.mxu0 0.0
  %811 = vmatpush.msra.mxu0 0.0
  %812 = vmatpush.msra.mxu0 0.0
  %813 = vmatpush.msra.mxu0 %v717
  %814 = vmatpush.msra.mxu0 %v714
  %815 = vmatmul.f32.gmra.mxu0 %v776
  %v816 = vpop.f32.mrf.mxu0
  %v817 = vadd.f32 %v738, %v816
  %818 = vmatmul.f32.gmra.mxu0 %v779
  %v819 = vpop.f32.mrf.mxu0
  %v820 = vadd.f32 %v743, %v819
  %821 = vmatmul.f32.gmra.mxu0 %v782
  %v822 = vpop.f32.mrf.mxu0
  %v823 = vadd.f32 %v748, %v822
  %824 = vmatmul.f32.gmra.mxu0 %v785
  %v825 = vpop.f32.mrf.mxu0
  %v826 = vadd.f32 %v753, %v825
  %827 = vmatmul.f32.gmra.mxu0 %v788
  %v828 = vpop.f32.mrf.mxu0
  %v829 = vadd.f32 %v758, %v828
  %830 = vmatmul.f32.gmra.mxu0 %v791
  %v831 = vpop.f32.mrf.mxu0
  %v832 = vadd.f32 %v763, %v831
  %833 = vmatmul.f32.gmra.mxu0 %v794
  %v834 = vpop.f32.mrf.mxu0
  %v835 = vadd.f32 %v768, %v834
  %836 = vmatmul.f32.gmra.mxu0 %v797
  %v837 = vpop.f32.mrf.mxu0
  %v838 = vadd.f32 %v773, %v837
  %839 = vdwg.mxu0
  %v840 = vmax.f32 %v817, 0.0
  %v841 = vmax.f32 %v820, 0.0
  %v842 = vmax.f32 %v823, 0.0
  %v843 = vmax.f32 %v826, 0.0
  %v844 = vmax.f32 %v829, 0.0
  %v845 = vmax.f32 %v832, 0.0
  %v846 = vmax.f32 %v835, 0.0
  %v847 = vmax.f32 %v838, 0.0
  %v848 = vld [vmem:[%s1 + $0x470] sm:$0xff]
  %v849 = vld [vmem:[%s1 + $0x478] sm:$0xff]
  %851 = vset.pattern.permute.xlu0 0
  %852 = vperm.xlu0 %851, %v849
  %v853 = vpop.permute.xlu0 %852
  %v856 = vsel %vm241, %v848, 0
  %858 = vmatpush.msra.mxu0 0.0
  %859 = vmatpush.msra.mxu0 0.0
  %860 = vmatpush.msra.mxu0 0.0
  %861 = vmatpush.msra.mxu0 0.0
  %862 = vmatpush.msra.mxu0 0.0
  %863 = vmatpush.msra.mxu0 0.0
  %864 = vmatpush.msra.mxu0 0.0
  %865 = vmatpush.msra.mxu0 0.0
  %866 = vmatpush.msra.mxu0 %v847
  %867 = vmatpush.msra.mxu0 %v846
  %868 = vmatpush.msra.mxu0 %v845
  %869 = vmatpush.msra.mxu0 %v844
  %870 = vmatpush.msra.mxu0 %v843
  %871 = vmatpush.msra.mxu0 %v842
  %872 = vmatpush.msra.mxu0 %v841
  %873 = vmatpush.msra.mxu0 %v840
  %874 = vmatmul.f32.gmra.mxu0 %v856
  %v875 = vpop.f32.mrf.mxu0
  %v876 = vadd.f32 %v853, %v875
  %877 = vdwg.mxu0
  %vm878 = vcmp.ge.f32.partialorder %v876, 0.0
  %v879 = vmul.f32 %v876, 0.1
  %v880 = vsel %vm878, %v876, %v879
  %v881 = vld [vmem:[%s1 + $0x480] sm:$0xff]
  %v883 = vsel %vm269, %v881, 0
  %885 = vmatpush.msra.mxu0 0.0
  %886 = vmatpush.msra.mxu0 0.0
  %887 = vmatpush.msra.mxu0 0.0
  %888 = vmatpush.msra.mxu0 0.0
  %889 = vmatpush.msra.mxu0 0.0
  %890 = vmatpush.msra.mxu0 0.0
  %891 = vmatpush.msra.mxu0 0.0
  %892 = vmatpush.msra.mxu0 0.0
  %893 = vmatpush.msra.mxu0 0.0
  %894 = vmatpush.msra.mxu0 0.0
  %895 = vmatpush.msra.mxu0 0.0
  %896 = vmatpush.msra.mxu0 0.0
  %897 = vmatpush.msra.mxu0 0.0
  %898 = vmatpush.msra.mxu0 0.0
  %899 = vmatpush.msra.mxu0 0.0
  %900 = vmatpush.msra.mxu0 %v880
  %901 = vmatmul.f32.gmra.mxu0 %v883
  %v902 = vpop.f32.mrf.mxu0
  %v903 = vadd.f32 0.0, %v902
  %904 = vdwg.mxu0
  %v905 = vld [vmem:[%s1 + $0x4a0] sm:$0xff]
  %v906 = vld [vmem:[%s1 + $0x4a8] sm:$0xff]
  %v908 = vsel %vm269, %v903, 0
  %910 = vmatpush.msra.mxu0 0.0
  %911 = vmatpush.msra.mxu0 0.0
  %912 = vmatpush.msra.mxu0 0.0
  %913 = vmatpush.msra.mxu0 0.0
  %914 = vmatpush.msra.mxu0 0.0
  %915 = vmatpush.msra.mxu0 0.0
  %916 = vmatpush.msra.mxu0 0.0
  %917 = vmatpush.msra.mxu0 0.0
  %918 = vmatpush.msra.mxu0 0.0
  %919 = vmatpush.msra.mxu0 0.0
  %920 = vmatpush.msra.mxu0 0.0
  %921 = vmatpush.msra.mxu0 0.0
  %922 = vmatpush.msra.mxu0 0.0
  %923 = vmatpush.msra.mxu0 0.0
  %924 = vmatpush.msra.mxu0 0.0
  %925 = vmatpush.msra.mxu0 %v905
  %926 = vmatmul.f32.gmra.mxu0 %v908
  %v927 = vpop.f32.mrf.mxu0
  %v928 = vadd.f32 %v906, %v927
  %929 = vdwg.mxu0
  %vm930 = vcmp.ge.f32.partialorder %v928, 0.0
  %v931 = vmul.f32 %v928, 0.1
  %v932 = vsel %vm930, %v928, %v931
  %v933 = vld [vmem:[%s1 + $0x488] sm:$0xff]
  %v935 = vsel %vm269, %v933, 0
  %937 = vmatpush.msra.mxu0 0.0
  %938 = vmatpush.msra.mxu0 0.0
  %939 = vmatpush.msra.mxu0 0.0
  %940 = vmatpush.msra.mxu0 0.0
  %941 = vmatpush.msra.mxu0 0.0
  %942 = vmatpush.msra.mxu0 0.0
  %943 = vmatpush.msra.mxu0 0.0
  %944 = vmatpush.msra.mxu0 0.0
  %945 = vmatpush.msra.mxu0 0.0
  %946 = vmatpush.msra.mxu0 0.0
  %947 = vmatpush.msra.mxu0 0.0
  %948 = vmatpush.msra.mxu0 0.0
  %949 = vmatpush.msra.mxu0 0.0
  %950 = vmatpush.msra.mxu0 0.0
  %951 = vmatpush.msra.mxu0 0.0
  %952 = vmatpush.msra.mxu0 %v880
  %953 = vmatmul.f32.gmra.mxu0 %v935
  %v954 = vpop.f32.mrf.mxu0
  %v955 = vadd.f32 0.0, %v954
  %956 = vdwg.mxu0
  %v957 = vld [vmem:[%s1 + $0x4b0] sm:$0xff]
  %v958 = vld [vmem:[%s1 + $0x4b8] sm:$0xff]
  %v960 = vsel %vm269, %v955, 0
  %962 = vmatpush.msra.mxu0 0.0
  %963 = vmatpush.msra.mxu0 0.0
  %964 = vmatpush.msra.mxu0 0.0
  %965 = vmatpush.msra.mxu0 0.0
  %966 = vmatpush.msra.mxu0 0.0
  %967 = vmatpush.msra.mxu0 0.0
  %968 = vmatpush.msra.mxu0 0.0
  %969 = vmatpush.msra.mxu0 0.0
  %970 = vmatpush.msra.mxu0 0.0
  %971 = vmatpush.msra.mxu0 0.0
  %972 = vmatpush.msra.mxu0 0.0
  %973 = vmatpush.msra.mxu0 0.0
  %974 = vmatpush.msra.mxu0 0.0
  %975 = vmatpush.msra.mxu0 0.0
  %976 = vmatpush.msra.mxu0 0.0
  %977 = vmatpush.msra.mxu0 %v957
  %978 = vmatmul.f32.gmra.mxu0 %v960
  %v979 = vpop.f32.mrf.mxu0
  %v980 = vadd.f32 %v958, %v979
  %981 = vdwg.mxu0
  %vm982 = vcmp.ge.f32.partialorder %v980, 0.0
  %v983 = vmul.f32 %v980, 0.1
  %v984 = vsel %vm982, %v980, %v983
  %v985 = vld [vmem:[%s1 + $0x490] sm:$0xff]
  %v987 = vsel %vm269, %v985, 0
  %989 = vmatpush.msra.mxu0 0.0
  %990 = vmatpush.msra.mxu0 0.0
  %991 = vmatpush.msra.mxu0 0.0
  %992 = vmatpush.msra.mxu0 0.0
  %993 = vmatpush.msra.mxu0 0.0
  %994 = vmatpush.msra.mxu0 0.0
  %995 = vmatpush.msra.mxu0 0.0
  %996 = vmatpush.msra.mxu0 0.0
  %997 = vmatpush.msra.mxu0 0.0
  %998 = vmatpush.msra.mxu0 0.0
  %999 = vmatpush.msra.mxu0 0.0
  %1000 = vmatpush.msra.mxu0 0.0
  %1001 = vmatpush.msra.mxu0 0.0
  %1002 = vmatpush.msra.mxu0 0.0
  %1003 = vmatpush.msra.mxu0 0.0
  %1004 = vmatpush.msra.mxu0 %v932
  %1005 = vmatmul.f32.gmra.mxu0 %v987
  %v1006 = vpop.f32.mrf.mxu0
  %v1007 = vadd.f32 0.0, %v1006
  %1008 = vdwg.mxu0
  %v1009 = vld [vmem:[%s1 + $0x4c0] sm:$0xff]
  %v1010 = vld [vmem:[%s1 + $0x4c8] sm:$0xff]
  %v1011 = vld [vmem:[%s1 + $0x4d0] sm:$0xff]
  %v1012 = vld [vmem:[%s1 + $0x4d8] sm:$0xff]
  %v1013 = vld [vmem:[%s1 + $0x4e0] sm:$0xff]
  %v1014 = vld [vmem:[%s1 + $0x4e8] sm:$0xff]
  %v1015 = vld [vmem:[%s1 + $0x4f0] sm:$0xff]
  %v1016 = vld [vmem:[%s1 + $0x4f8] sm:$0xff]
  %v1017 = vld [vmem:[%s1 + $0x500] sm:$0xff]
  %v1018 = vld [vmem:[%s1 + $0x508] sm:$0xff]
  %v1019 = vld [vmem:[%s1 + $0x510] sm:$0xff]
  %v1020 = vld [vmem:[%s1 + $0x518] sm:$0xff]
  %v1021 = vld [vmem:[%s1 + $0x520] sm:$0xff]
  %v1022 = vld [vmem:[%s1 + $0x528] sm:$0xff]
  %v1023 = vld [vmem:[%s1 + $0x530] sm:$0xff]
  %v1024 = vld [vmem:[%s1 + $0x538] sm:$0xff]
  %1025 = vmatpush.msra.mxu0 %v1024
  %1026 = vmatpush.msra.mxu0 %v1023
  %1027 = vmatpush.msra.mxu0 %v1022
  %1028 = vmatpush.msra.mxu0 %v1021
  %1029 = vmatpush.msra.mxu0 %v1020
  %1030 = vmatpush.msra.mxu0 %v1019
  %1031 = vmatpush.msra.mxu0 %v1018
  %1032 = vmatpush.msra.mxu0 %v1017
  %1033 = vmatpush.msra.mxu0 %v1016
  %1034 = vmatpush.msra.mxu0 %v1015
  %1035 = vmatpush.msra.mxu0 %v1014
  %1036 = vmatpush.msra.mxu0 %v1013
  %1037 = vmatpush.msra.mxu0 %v1012
  %1038 = vmatpush.msra.mxu0 %v1011
  %1039 = vmatpush.msra.mxu0 %v1010
  %1040 = vmatpush.msra.mxu0 %v1009
  %1041 = vmatmul.f32.gmra.mxu0 %v1007
  %v1042 = vpop.f32.mrf.mxu0
  %v1043 = vadd.f32 0.0, %v1042
  %1044 = vdwg.mxu0
  %v1045 = vld [vmem:[%s1 + $0x498] sm:$0xff]
  %v1047 = vsel %vm269, %v1045, 0
  %1049 = vmatpush.msra.mxu0 0.0
  %1050 = vmatpush.msra.mxu0 0.0
  %1051 = vmatpush.msra.mxu0 0.0
  %1052 = vmatpush.msra.mxu0 0.0
  %1053 = vmatpush.msra.mxu0 0.0
  %1054 = vmatpush.msra.mxu0 0.0
  %1055 = vmatpush.msra.mxu0 0.0
  %1056 = vmatpush.msra.mxu0 0.0
  %1057 = vmatpush.msra.mxu0 0.0
  %1058 = vmatpush.msra.mxu0 0.0
  %1059 = vmatpush.msra.mxu0 0.0
  %1060 = vmatpush.msra.mxu0 0.0
  %1061 = vmatpush.msra.mxu0 0.0
  %1062 = vmatpush.msra.mxu0 0.0
  %1063 = vmatpush.msra.mxu0 0.0
  %1064 = vmatpush.msra.mxu0 %v984
  %1065 = vmatmul.f32.gmra.mxu0 %v1047
  %v1066 = vpop.f32.mrf.mxu0
  %v1067 = vadd.f32 0.0, %v1066
  %1068 = vdwg.mxu0
  %v1069 = vld [vmem:[%s1 + $0x540] sm:$0xff]
  %v1070 = vld [vmem:[%s1 + $0x548] sm:$0xff]
  %v1071 = vld [vmem:[%s1 + $0x550] sm:$0xff]
  %v1072 = vld [vmem:[%s1 + $0x558] sm:$0xff]
  %v1073 = vld [vmem:[%s1 + $0x560] sm:$0xff]
  %v1074 = vld [vmem:[%s1 + $0x568] sm:$0xff]
  %v1075 = vld [vmem:[%s1 + $0x570] sm:$0xff]
  %v1076 = vld [vmem:[%s1 + $0x578] sm:$0xff]
  %v1077 = vld [vmem:[%s1 + $0x580] sm:$0xff]
  %v1078 = vld [vmem:[%s1 + $0x588] sm:$0xff]
  %v1079 = vld [vmem:[%s1 + $0x590] sm:$0xff]
  %v1080 = vld [vmem:[%s1 + $0x598] sm:$0xff]
  %v1081 = vld [vmem:[%s1 + $0x5a0] sm:$0xff]
  %v1082 = vld [vmem:[%s1 + $0x5a8] sm:$0xff]
  %v1083 = vld [vmem:[%s1 + $0x5b0] sm:$0xff]
  %v1084 = vld [vmem:[%s1 + $0x5b8] sm:$0xff]
  %1085 = vmatpush.msra.mxu0 %v1084
  %1086 = vmatpush.msra.mxu0 %v1083
  %1087 = vmatpush.msra.mxu0 %v1082
  %1088 = vmatpush.msra.mxu0 %v1081
  %1089 = vmatpush.msra.mxu0 %v1080
  %1090 = vmatpush.msra.mxu0 %v1079
  %1091 = vmatpush.msra.mxu0 %v1078
  %1092 = vmatpush.msra.mxu0 %v1077
  %1093 = vmatpush.msra.mxu0 %v1076
  %1094 = vmatpush.msra.mxu0 %v1075
  %1095 = vmatpush.msra.mxu0 %v1074
  %1096 = vmatpush.msra.mxu0 %v1073
  %1097 = vmatpush.msra.mxu0 %v1072
  %1098 = vmatpush.msra.mxu0 %v1071
  %1099 = vmatpush.msra.mxu0 %v1070
  %1100 = vmatpush.msra.mxu0 %v1069
  %1101 = vmatmul.f32.gmra.mxu0 %v1067
  %v1102 = vpop.f32.mrf.mxu0
  %v1103 = vadd.f32 0.0, %v1102
  %1104 = vdwg.mxu0
  %v1105 = vld [vmem:[%s1 + $0x5c0] sm:$0xff]
  %v1106 = vld [vmem:[%s1 + $0x5c8] sm:$0xf]
  %v1107 = vld [vmem:[%s1 + $0x5e0] sm:$0xff]
  %v1108 = vld [vmem:[%s1 + $0x5e8] sm:$0xf]
  %v1110 = vsel %vm269, %v1105, 0
  %v1113 = vsel %vm269, %v1106, 0
  %1115 = vmatpush.msra.mxu0 0.0
  %1116 = vmatpush.msra.mxu0 0.0
  %1117 = vmatpush.msra.mxu0 0.0
  %1118 = vmatpush.msra.mxu0 0.0
  %1119 = vmatpush.msra.mxu0 0.0
  %1120 = vmatpush.msra.mxu0 0.0
  %1121 = vmatpush.msra.mxu0 0.0
  %1122 = vmatpush.msra.mxu0 0.0
  %1123 = vmatpush.msra.mxu0 0.0
  %1124 = vmatpush.msra.mxu0 0.0
  %1125 = vmatpush.msra.mxu0 0.0
  %1126 = vmatpush.msra.mxu0 0.0
  %1127 = vmatpush.msra.mxu0 0.0
  %1128 = vmatpush.msra.mxu0 0.0
  %1129 = vmatpush.msra.mxu0 0.0
  %1130 = vmatpush.msra.mxu0 %v1043
  %1131 = vmatmul.f32.gmra.mxu0 %v1110
  %v1132 = vpop.f32.mrf.mxu0
  %v1133 = vadd.f32 %v1107, %v1132
  %1134 = vmatmul.f32.gmra.mxu0 %v1113
  %v1135 = vpop.f32.mrf.mxu0
  %v1136 = vadd.f32 %v1108, %v1135
  %1137 = vdwg.mxu0
  %v1138 = vld [vmem:[%s1 + $0x5d0] sm:$0xff]
  %v1139 = vld [vmem:[%s1 + $0x5d8] sm:$0xf]
  %v1140 = vld [vmem:[%s1 + $0x5f0] sm:$0xff]
  %v1141 = vld [vmem:[%s1 + $0x5f8] sm:$0xf]
  %v1143 = vsel %vm269, %v1138, 0
  %v1146 = vsel %vm269, %v1139, 0
  %1148 = vmatpush.msra.mxu0 0.0
  %1149 = vmatpush.msra.mxu0 0.0
  %1150 = vmatpush.msra.mxu0 0.0
  %1151 = vmatpush.msra.mxu0 0.0
  %1152 = vmatpush.msra.mxu0 0.0
  %1153 = vmatpush.msra.mxu0 0.0
  %1154 = vmatpush.msra.mxu0 0.0
  %1155 = vmatpush.msra.mxu0 0.0
  %1156 = vmatpush.msra.mxu0 0.0
  %1157 = vmatpush.msra.mxu0 0.0
  %1158 = vmatpush.msra.mxu0 0.0
  %1159 = vmatpush.msra.mxu0 0.0
  %1160 = vmatpush.msra.mxu0 0.0
  %1161 = vmatpush.msra.mxu0 0.0
  %1162 = vmatpush.msra.mxu0 0.0
  %1163 = vmatpush.msra.mxu0 %v1103
  %1164 = vmatmul.f32.gmra.mxu0 %v1143
  %v1165 = vpop.f32.mrf.mxu0
  %v1166 = vadd.f32 %v1140, %v1165
  %1167 = vmatmul.f32.gmra.mxu0 %v1146
  %v1168 = vpop.f32.mrf.mxu0
  %v1169 = vadd.f32 %v1141, %v1168
  %1170 = vdwg.mxu0
  %v1171 = vsel %vm13, %v1133, -1e+30
  %v1172 = vsel %vm13, %v1136, -1e+30
  %1173 = vmax.xlane.f32.xlu0 %v1171
  %v1174 = vpop.xlane.xlu0 %1173
  %v1175 = vsel %vm556, %v1172, -inf
  %1176 = vmax.xlane.f32.xlu0 %v1175
  %v1177 = vpop.xlane.xlu0 %1176
  %v1178 = vsel %vm13, -1e+30, %v1133
  %v1179 = vsel %vm13, -1e+30, %v1136
  %1180 = vmax.xlane.f32.xlu0 %v1178
  %v1181 = vpop.xlane.xlu0 %1180
  %v1182 = vsel %vm556, %v1179, -inf
  %1183 = vmax.xlane.f32.xlu0 %v1182
  %v1184 = vpop.xlane.xlu0 %1183
  %v1185 = vsel %vm13, %v1174, %v1181
  %v1186 = vsel %vm13, %v1177, %v1184
  %v1187 = vsub.f32 %v1133, %v1185
  %v1188 = vsub.f32 %v1136, %v1186
  %v1189 = vmul.f32 %v1187, 1.442695
  %v1190 = vpow.pop %v1189
  %v1191 = vmul.f32 %v1188, 1.442695
  %v1192 = vpow.pop %v1191
  %v1193 = vsel %vm13, %v1190, 0.0
  %v1194 = vsel %vm13, %v1192, 0.0
  %1195 = vadd.xlane.f32.xlu0 %v1193
  %v1196 = vpop.xlane.xlu0 %1195
  %v1197 = vsel %vm556, %v1194, 0.0
  %1198 = vadd.xlane.f32.xlu0 %v1197
  %v1199 = vpop.xlane.xlu0 %1198
  %v1200 = vsel %vm13, 0.0, %v1190
  %v1201 = vsel %vm13, 0.0, %v1192
  %1202 = vadd.xlane.f32.xlu0 %v1200
  %v1203 = vpop.xlane.xlu0 %1202
  %v1204 = vsel %vm556, %v1201, 0.0
  %1205 = vadd.xlane.f32.xlu0 %v1204
  %v1206 = vpop.xlane.xlu0 %1205
  %v1207 = vsel %vm13, %v1196, %v1203
  %v1208 = vsel %vm13, %v1199, %v1206
  %v1209 = vrcp.pop %v1207
  %v1210 = vrcp.pop %v1208
  %v1211 = vmul.f32 %v1190, %v1209
  %v1212 = vmul.f32 %v1192, %v1210
  %v1213 = vmul.f32 %v1211, %v1166
  %v1214 = vmul.f32 %v1212, %v1169
  %v1215 = vld [vmem:[%s1 + $0xa0] sm:$0xff]
  %v1216 = vld [vmem:[%s1 + $0xa8] sm:$0xff]
  %v1217 = vld [vmem:[%s1 + $0xb0] sm:$0xff]
  %v1218 = vld [vmem:[%s1 + $0xb8] sm:$0xff]
  %v1219 = vld [vmem:[%s1 + $0xc0] sm:$0xff]
  %v1220 = vld [vmem:[%s1 + $0xc8] sm:$0xff]
  %v1221 = vld [vmem:[%s1 + $0xd0] sm:$0xff]
  %v1222 = vld [vmem:[%s1 + $0xd8] sm:$0xff]
  %v1223 = vld [vmem:[%s1 + $0xe0] sm:$0xff]
  %v1224 = vld [vmem:[%s1 + $0xe8] sm:$0xff]
  %v1225 = vld [vmem:[%s1 + $0xf0] sm:$0xff]
  %v1226 = vld [vmem:[%s1 + $0xf8] sm:$0xff]
  %v1227 = vld [vmem:[%s1 + $0x100] sm:$0xff]
  %v1228 = vld [vmem:[%s1 + $0x108] sm:$0xff]
  %v1229 = vld [vmem:[%s1 + $0x110] sm:$0xff]
  %v1230 = vld [vmem:[%s1 + $0x118] sm:$0xff]
  %v1231 = vld [vmem:[%s1 + $0x120] sm:$0xff]
  %v1232 = vld [vmem:[%s1 + $0x128] sm:$0xff]
  %v1233 = vld [vmem:[%s1 + $0x130] sm:$0xff]
  %v1234 = vld [vmem:[%s1 + $0x138] sm:$0xff]
  %v1235 = vld [vmem:[%s1 + $0x140] sm:$0xff]
  %v1236 = vld [vmem:[%s1 + $0x148] sm:$0xff]
  %v1237 = vld [vmem:[%s1 + $0x150] sm:$0xff]
  %v1238 = vld [vmem:[%s1 + $0x158] sm:$0xff]
  %v1239 = vld [vmem:[%s1 + $0x160] sm:$0xff]
  %v1240 = vld [vmem:[%s1 + $0x168] sm:$0xff]
  %v1241 = vld [vmem:[%s1 + $0x170] sm:$0xff]
  %v1242 = vld [vmem:[%s1 + $0x178] sm:$0xff]
  %v1243 = vld [vmem:[%s1 + $0x180] sm:$0xff]
  %v1244 = vld [vmem:[%s1 + $0x188] sm:$0xff]
  %v1245 = vld [vmem:[%s1 + $0x190] sm:$0xff]
  %v1246 = vld [vmem:[%s1 + $0x198] sm:$0xff]
  %1247 = vmatpush.msra.mxu0 %v1246
  %1248 = vmatpush.msra.mxu0 %v1245
  %1249 = vmatpush.msra.mxu0 %v1244
  %1250 = vmatpush.msra.mxu0 %v1243
  %1251 = vmatpush.msra.mxu0 %v1242
  %1252 = vmatpush.msra.mxu0 %v1241
  %1253 = vmatpush.msra.mxu0 %v1240
  %1254 = vmatpush.msra.mxu0 %v1239
  %1255 = vmatpush.msra.mxu0 %v1238
  %1256 = vmatpush.msra.mxu0 %v1237
  %1257 = vmatpush.msra.mxu0 %v1236
  %1258 = vmatpush.msra.mxu0 %v1235
  %1259 = vmatpush.msra.mxu0 %v1234
  %1260 = vmatpush.msra.mxu0 %v1233
  %1261 = vmatpush.msra.mxu0 %v1232
  %1262 = vmatpush.msra.mxu0 %v1231
  %1263 = vmatmul.f32.gmra.mxu0 %v1213
  %v1264 = vpop.f32.mrf.mxu0
  %v1265 = vadd.f32 0.0, %v1264
  %1266 = vmatmul.f32.gmra.mxu0 %v1214
  %v1267 = vpop.f32.mrf.mxu0
  %v1268 = vadd.f32 0.0, %v1267
  %1269 = vdwg.mxu0
  %1270 = vmatpush.msra.mxu0 %v1230
  %1271 = vmatpush.msra.mxu0 %v1229
  %1272 = vmatpush.msra.mxu0 %v1228
  %1273 = vmatpush.msra.mxu0 %v1227
  %1274 = vmatpush.msra.mxu0 %v1226
  %1275 = vmatpush.msra.mxu0 %v1225
  %1276 = vmatpush.msra.mxu0 %v1224
  %1277 = vmatpush.msra.mxu0 %v1223
  %1278 = vmatpush.msra.mxu0 %v1222
  %1279 = vmatpush.msra.mxu0 %v1221
  %1280 = vmatpush.msra.mxu0 %v1220
  %1281 = vmatpush.msra.mxu0 %v1219
  %1282 = vmatpush.msra.mxu0 %v1218
  %1283 = vmatpush.msra.mxu0 %v1217
  %1284 = vmatpush.msra.mxu0 %v1216
  %1285 = vmatpush.msra.mxu0 %v1215
  %1286 = vmatmul.f32.gmra.mxu0 %v1211
  %v1287 = vpop.f32.mrf.mxu0
  %v1288 = vadd.f32 %v1265, %v1287
  %1289 = vmatmul.f32.gmra.mxu0 %v1212
  %v1290 = vpop.f32.mrf.mxu0
  %v1291 = vadd.f32 %v1268, %v1290
  %1292 = vdwg.mxu0
  %1293 = vst [vmem:[%s2] sm:$0xff] %v1211
  %1294 = vst [vmem:[%s2 + $0x8] sm:$0xff] %v1213
  %1295 = vst [vmem:[%s2 + $0x10] sm:$0xff] %v1288
  %1296 = vst [vmem:[%s2 + $0x18] sm:$0xf] %v1212
  %1297 = vst [vmem:[%s2 + $0x20] sm:$0xf] %v1214
  %1298 = vst [vmem:[%s2 + $0x28] sm:$0xf] %v1291
  // Predicated region
  $region10: #{fwd.1} parent=0 // pred_check
    _
  $region11: #{fwd.1} parent=0 // pred_check_branch
    %1300 = sbr.rel (0) target = $region13
  $region12: #{fwd.1} parent=0 // pred_region
    _
  $region13: #{fwd.1} parent=0 // pred_fallthru
    _
  // Predicated region
  $region14: #{fwd.1} parent=0 // pred_check
    _
  $region15: #{fwd.1} parent=0 // pred_check_branch
    %1302 = sbr.rel (0) target = $region17
  $region16: #{fwd.1} parent=0 // pred_region
    _
  $region17: #{fwd.1} parent=0 // pred_fallthru
    _

</llo_original>
